<compile_context>
chip_gen: v6e
topology: v6e:2x2x1
jax: 0.10.0
libtpu: 0.0.40
codegen_flags: <defaults>
</compile_context>

<pallas_src>
import jax
import jax.numpy as jnp
from jax import lax
from jax.experimental import pallas as pl
from jax.experimental.pallas import tpu as pltpu

# ---------------- model config (small, consistent with the module) ----------------
BATCH = 2
SEQ = 8
EMBED = 32
HEADS = 4
FWD_EXP = 4
HIDDEN = FWD_EXP * EMBED
HEAD_DIM = EMBED // HEADS
LN_EPS = 1e-5


def _transformer_block_kernel(
    x_ref,        # (B*S, E)
    mask_ref,     # (B*S, B*S) block-diagonal additive float mask
    w_in_ref,     # (E, 3E)  in_proj weight, transposed; Q columns pre-scaled by 1/sqrt(Dh)
    w_out_ref,    # (E, E)   out_proj weight, transposed
    w1_ref,       # (E, H)   ffn linear1 weight, transposed
    w2_ref,       # (H, E)   ffn linear2 weight, transposed
    vecs_ref,     # (8, 128) packed: b_in | b_out | g1 | bt1 | b1 | b2 | g2 | bt2
    o_ref,        # (B*S, E)
):
    x = x_ref[...].astype(jnp.float32)                      # (BS, E)
    mask = mask_ref[...].astype(jnp.float32)                 # (BS, BS)
    vecs = vecs_ref[...]                                     # (8, 128)

    b_in = vecs[0:1, : 3 * EMBED]
    b_out = vecs[1:2, :EMBED]
    g1 = vecs[2:3, :EMBED]
    bt1 = vecs[3:4, :EMBED]
    b1 = vecs[4:5, :HIDDEN]
    b2 = vecs[5:6, :EMBED]
    g2 = vecs[6:7, :EMBED]
    bt2 = vecs[7:8, :EMBED]

    # ---- QKV projection (Q already scaled by 1/sqrt(Dh) via the weights) ------
    qkv = jnp.dot(x, w_in_ref[...], preferred_element_type=jnp.float32) + b_in   # (BS, 3E)

    w_out = w_out_ref[...]                                    # (E, E)

    # ---- per-head attention, fused with out_proj accumulation ------------------
    # attn @ W_out == sum_h (P_h @ V_h) @ W_out[h*Dh:(h+1)*Dh, :]
    attn_out = None
    for h in range(HEADS):
        lo = h * HEAD_DIM
        qh = qkv[:, lo:lo + HEAD_DIM]                          # (BS, Dh)
        kh = qkv[:, EMBED + lo:EMBED + lo + HEAD_DIM]          # (BS, Dh)
        vh = qkv[:, 2 * EMBED + lo:2 * EMBED + lo + HEAD_DIM]  # (BS, Dh)

        # q @ k^T without materializing the transpose (contract over head_dim).
        s = lax.dot_general(qh, kh, (((1,), (1,)), ((), ())),
                            preferred_element_type=jnp.float32)                  # (BS, BS)
        s = s + mask
        s = s - jnp.max(s, axis=-1, keepdims=True)
        p = jnp.exp(s)
        p = p * pl.reciprocal(jnp.sum(p, axis=-1, keepdims=True), approx=True)

        oh = jnp.dot(p, vh, preferred_element_type=jnp.float32)                  # (BS, Dh)
        contrib = jnp.dot(oh, w_out[lo:lo + HEAD_DIM, :],
                          preferred_element_type=jnp.float32)                    # (BS, E)
        attn_out = contrib if attn_out is None else attn_out + contrib
    attn_out = attn_out + b_out

    # ---- residual + LayerNorm 1 (dropout identity in eval mode) ----------------
    h1 = x + attn_out
    mu1 = jnp.mean(h1, axis=-1, keepdims=True)
    var1 = jnp.mean((h1 - mu1) ** 2, axis=-1, keepdims=True)
    h1 = (h1 - mu1) * lax.rsqrt(var1 + LN_EPS) * g1 + bt1

    # ---- feed-forward -----------------------------------------------------------
    ff = jnp.dot(h1, w1_ref[...], preferred_element_type=jnp.float32) + b1
    ff = jnp.maximum(ff, 0.0)
    ff = jnp.dot(ff, w2_ref[...], preferred_element_type=jnp.float32) + b2

    # ---- residual + LayerNorm 2 -------------------------------------------------
    h2 = h1 + ff
    mu2 = jnp.mean(h2, axis=-1, keepdims=True)
    var2 = jnp.mean((h2 - mu2) ** 2, axis=-1, keepdims=True)
    out = (h2 - mu2) * lax.rsqrt(var2 + LN_EPS) * g2 + bt2

    o_ref[...] = out.astype(o_ref.dtype)


def transformer_block(src, mask, params):
    """src: (B, S, E) float32, mask: (S, S) additive float mask."""
    B, S, E = src.shape
    BS = B * S
    H3 = 3 * E
    scale = 1.0 / (HEAD_DIM ** 0.5)

    # Fold the attention scale into the Q part of the in-projection (weight AND bias).
    w_in_t = params["w_in_t"].at[:, :E].multiply(scale)
    b_in = params["b_in"].at[:, :E].multiply(scale)

    # Block-diagonal additive mask: folding (B, S) -> (B*S,) rows must not let batch
    # elements attend to each other.  -1e9 entries underflow to exactly 0 after softmax.
    row_b = jnp.arange(BS) // S
    same_batch = row_b[:, None] == row_b[None, :]
    mask_big = jnp.where(same_batch, jnp.tile(mask.astype(jnp.float32), (B, B)),
                         jnp.float32(-1e9))

    # Pack the 8 small per-feature vectors into one (8, 128) slab (one DMA stream).
    def _row(v):
        v = v.reshape(-1).astype(jnp.float32)
        return jnp.pad(v, (0, 128 - v.shape[0]))

    vecs = jnp.stack([
        _row(b_in), _row(params["b_out"]), _row(params["g1"]), _row(params["bt1"]),
        _row(params["b1"]), _row(params["b2"]), _row(params["g2"]), _row(params["bt2"]),
    ])                                                          # (8, 128)

    src2d = src.reshape(BS, E)

    full = lambda shape: pl.BlockSpec(shape, lambda i: tuple(0 for _ in shape))

    out2d = pl.pallas_call(
        _transformer_block_kernel,
        out_shape=jax.ShapeDtypeStruct((BS, E), src.dtype),
        grid=(1,),
        in_specs=[
            full((BS, E)),          # x (all batch rows in one block)
            full((BS, BS)),         # block-diagonal mask
            full((E, H3)),          # in_proj weight (Q-scaled)
            full((E, E)),           # out_proj weight
            full((E, HIDDEN)),      # ffn linear1 weight
            full((HIDDEN, E)),      # ffn linear2 weight
            full((8, 128)),         # packed bias/gamma/beta vectors
        ],
        out_specs=full((BS, E)),
        compiler_params=pltpu.CompilerParams(dimension_semantics=("arbitrary",)),
    )(src2d, mask_big, w_in_t, params["w_out_t"], params["w1_t"], params["w2_t"], vecs)

    return out2d.reshape(B, S, E)


# ------------------------- pure-JAX reference (for checking) -------------------------
def reference_forward(src, mask, p):
    B, S, E = src.shape
    qkv = src @ p["w_in_t"] + p["b_in"]                    # (B, S, 3E)
    q, k, v = qkv[..., :E], qkv[..., E:2 * E], qkv[..., 2 * E:]
    qh = q.reshape(B, S, HEADS, HEAD_DIM).transpose(0, 2, 1, 3)
    kh = k.reshape(B, S, HEADS, HEAD_DIM).transpose(0, 2, 1, 3)
    vh = v.reshape(B, S, HEADS, HEAD_DIM).transpose(0, 2, 1, 3)
    scores = jnp.einsum("bhqd,bhkd->bhqk", qh, kh) / (HEAD_DIM ** 0.5) + mask
    pattn = jax.nn.softmax(scores, axis=-1)
    attn = jnp.einsum("bhqk,bhkd->bhqd", pattn, vh).transpose(0, 2, 1, 3).reshape(B, S, E)
    attn = attn @ p["w_out_t"] + p["b_out"]

    def ln(x, g, b):
        mu = x.mean(-1, keepdims=True)
        var = ((x - mu) ** 2).mean(-1, keepdims=True)
        return (x - mu) * lax.rsqrt(var + LN_EPS) * g + b

    h = ln(src + attn, p["g1"], p["bt1"])
    ff = jnp.maximum(h @ p["w1_t"] + p["b1"], 0.0) @ p["w2_t"] + p["b2"]
    return ln(h + ff, p["g2"], p["bt2"])


if __name__ == "__main__":
    key = jax.random.PRNGKey(0)
    ks = jax.random.split(key, 10)

    # Deterministic parameter init (shapes from nn.MultiheadAttention / nn.Linear / nn.LayerNorm).
    params = {
        "w_in_t": 0.05 * jax.random.normal(ks[0], (EMBED, 3 * EMBED), jnp.float32),
        "b_in":   0.01 * jax.random.normal(ks[1], (1, 3 * EMBED), jnp.float32),
        "w_out_t": 0.05 * jax.random.normal(ks[2], (EMBED, EMBED), jnp.float32),
        "b_out":  0.01 * jax.random.normal(ks[3], (1, EMBED), jnp.float32),
        "g1":  jnp.ones((1, EMBED), jnp.float32),
        "bt1": jnp.zeros((1, EMBED), jnp.float32),
        "w1_t": 0.05 * jax.random.normal(ks[4], (EMBED, HIDDEN), jnp.float32),
        "b1":   0.01 * jax.random.normal(ks[5], (1, HIDDEN), jnp.float32),
        "w2_t": 0.05 * jax.random.normal(ks[6], (HIDDEN, EMBED), jnp.float32),
        "b2":   0.01 * jax.random.normal(ks[7], (1, EMBED), jnp.float32),
        "g2":  jnp.ones((1, EMBED), jnp.float32),
        "bt2": jnp.zeros((1, EMBED), jnp.float32),
    }

    src = jax.random.normal(ks[8], (BATCH, SEQ, EMBED), jnp.float32)
    # Additive float attention mask (causal): 0 where allowed, -1e9 where masked.
    causal = jnp.triu(jnp.ones((SEQ, SEQ), jnp.bool_), k=1)
    mask = jnp.where(causal, jnp.float32(-1e9), jnp.float32(0.0))

    out = transformer_block(src, mask, params)
    out = jax.block_until_ready(out)

    ref = reference_forward(src, mask, params)
    assert out.shape == (BATCH, SEQ, EMBED)
    # Tolerance accommodates the EUP approximate-reciprocal softmax denominator.
    assert jnp.allclose(out, ref, atol=1e-3, rtol=1e-3), float(jnp.max(jnp.abs(out - ref)))

    print("KERNEL_OK")
</pallas_src>

<mosaic_0001>
module attributes {stable_mosaic.version = 11 : i64} {
  func.func @_transformer_block_kernel(%arg0: i32, %arg1: memref<16x32xf32, #tpu.memory_space<vmem>>, %arg2: memref<16x16xf32, #tpu.memory_space<vmem>>, %arg3: memref<32x96xf32, #tpu.memory_space<vmem>>, %arg4: memref<32x32xf32, #tpu.memory_space<vmem>>, %arg5: memref<32x128xf32, #tpu.memory_space<vmem>>, %arg6: memref<128x32xf32, #tpu.memory_space<vmem>>, %arg7: memref<8x128xf32, #tpu.memory_space<vmem>>, %arg8: memref<16x32xf32, #tpu.memory_space<vmem>>) attributes {dimension_semantics = [#tpu.dimension_semantics<arbitrary>], iteration_bounds = array<i64: 1>, scalar_prefetch = 0 : i64, scratch_operands = 0 : i64, tpu.core_type = #tpu.core_type<tc>, window_params = [{pipeline_mode = #tpu.pipeline_mode<synchronous>, transform_indices = @transform_0, window_bounds = array<i64: 16, 32>}, {pipeline_mode = #tpu.pipeline_mode<synchronous>, transform_indices = @transform_1, window_bounds = array<i64: 16, 16>}, {pipeline_mode = #tpu.pipeline_mode<synchronous>, transform_indices = @transform_2, window_bounds = array<i64: 32, 96>}, {pipeline_mode = #tpu.pipeline_mode<synchronous>, transform_indices = @transform_3, window_bounds = array<i64: 32, 32>}, {pipeline_mode = #tpu.pipeline_mode<synchronous>, transform_indices = @transform_4, window_bounds = array<i64: 32, 128>}, {pipeline_mode = #tpu.pipeline_mode<synchronous>, transform_indices = @transform_5, window_bounds = array<i64: 128, 32>}, {pipeline_mode = #tpu.pipeline_mode<synchronous>, transform_indices = @transform_6, window_bounds = array<i64: 8, 128>}, {pipeline_mode = #tpu.pipeline_mode<synchronous>, transform_indices = @transform_7, window_bounds = array<i64: 16, 32>}]} {
    %c0 = arith.constant 0 : index
    %c0_0 = arith.constant 0 : index
    %0 = vector.load %arg1[%c0, %c0_0] : memref<16x32xf32, #tpu.memory_space<vmem>>, vector<16x32xf32>
    %c0_1 = arith.constant 0 : index
    %c0_2 = arith.constant 0 : index
    %1 = vector.load %arg2[%c0_1, %c0_2] : memref<16x16xf32, #tpu.memory_space<vmem>>, vector<16x16xf32>
    %c0_3 = arith.constant 0 : index
    %c0_4 = arith.constant 0 : index
    %2 = vector.load %arg7[%c0_3, %c0_4] : memref<8x128xf32, #tpu.memory_space<vmem>>, vector<8x128xf32>
    %3 = vector.extract_strided_slice %2 {offsets = [0, 0], sizes = [1, 96], strides = [1, 1]} : vector<8x128xf32> to vector<1x96xf32>
    %4 = vector.extract_strided_slice %2 {offsets = [1, 0], sizes = [1, 32], strides = [1, 1]} : vector<8x128xf32> to vector<1x32xf32>
    %5 = vector.extract_strided_slice %2 {offsets = [2, 0], sizes = [1, 32], strides = [1, 1]} : vector<8x128xf32> to vector<1x32xf32>
    %6 = vector.extract_strided_slice %2 {offsets = [3, 0], sizes = [1, 32], strides = [1, 1]} : vector<8x128xf32> to vector<1x32xf32>
    %7 = vector.extract_strided_slice %2 {offsets = [4, 0], sizes = [1, 128], strides = [1, 1]} : vector<8x128xf32> to vector<1x128xf32>
    %8 = vector.extract_strided_slice %2 {offsets = [5, 0], sizes = [1, 32], strides = [1, 1]} : vector<8x128xf32> to vector<1x32xf32>
    %9 = vector.extract_strided_slice %2 {offsets = [6, 0], sizes = [1, 32], strides = [1, 1]} : vector<8x128xf32> to vector<1x32xf32>
    %10 = vector.extract_strided_slice %2 {offsets = [7, 0], sizes = [1, 32], strides = [1, 1]} : vector<8x128xf32> to vector<1x32xf32>
    %c0_5 = arith.constant 0 : index
    %c0_6 = arith.constant 0 : index
    %11 = vector.load %arg3[%c0_5, %c0_6] : memref<32x96xf32, #tpu.memory_space<vmem>>, vector<32x96xf32>
    %cst = arith.constant dense<0.000000e+00> : vector<16x96xf32>
    %12 = tpu.matmul %0, %11, %cst {dimension_numbers = #tpu.dot_dimension_numbers<[1], [0], [0], [1], [0, 0, 1, 1], [], []>} : vector<16x32xf32>, vector<32x96xf32>, vector<16x96xf32> -> vector<16x96xf32>
    %13 = vector.broadcast %3 : vector<1x96xf32> to vector<16x96xf32>
    %14 = arith.addf %12, %13 : vector<16x96xf32>
    %c0_7 = arith.constant 0 : index
    %c0_8 = arith.constant 0 : index
    %15 = vector.load %arg4[%c0_7, %c0_8] : memref<32x32xf32, #tpu.memory_space<vmem>>, vector<32x32xf32>
    %16 = vector.extract_strided_slice %14 {offsets = [0, 0], sizes = [16, 8], strides = [1, 1]} : vector<16x96xf32> to vector<16x8xf32>
    %17 = vector.extract_strided_slice %14 {offsets = [0, 32], sizes = [16, 8], strides = [1, 1]} : vector<16x96xf32> to vector<16x8xf32>
    %18 = vector.extract_strided_slice %14 {offsets = [0, 64], sizes = [16, 8], strides = [1, 1]} : vector<16x96xf32> to vector<16x8xf32>
    %cst_9 = arith.constant dense<0.000000e+00> : vector<16x16xf32>
    %19 = tpu.matmul %16, %17, %cst_9 {dimension_numbers = #tpu.dot_dimension_numbers<[1], [1], [0], [0], [0, 0, 1, 0], [], []>} : vector<16x8xf32>, vector<16x8xf32>, vector<16x16xf32> -> vector<16x16xf32>
    %20 = arith.addf %19, %1 : vector<16x16xf32>
    %cst_10 = arith.constant dense<0xFF800000> : vector<16xf32>
    %21 = vector.multi_reduction <maximumf>, %20, %cst_10 [1] : vector<16x16xf32> to vector<16xf32>
    %22 = vector.shape_cast %21 : vector<16xf32> to vector<16x1xf32>
    %23 = vector.broadcast %22 : vector<16x1xf32> to vector<16x16xf32>
    %24 = arith.subf %20, %23 : vector<16x16xf32>
    %25 = math.exp %24 : vector<16x16xf32>
    %cst_11 = arith.constant dense<0.000000e+00> : vector<16xf32>
    %26 = vector.multi_reduction <add>, %25, %cst_11 [1] : vector<16x16xf32> to vector<16xf32>
    %27 = vector.shape_cast %26 : vector<16xf32> to vector<16x1xf32>
    %28 = tpu.reciprocal %27 {approx = true} : vector<16x1xf32> -> vector<16x1xf32>
    %29 = vector.broadcast %28 : vector<16x1xf32> to vector<16x16xf32>
    %30 = arith.mulf %25, %29 : vector<16x16xf32>
    %cst_12 = arith.constant dense<0.000000e+00> : vector<16x8xf32>
    %31 = tpu.matmul %30, %18, %cst_12 {dimension_numbers = #tpu.dot_dimension_numbers<[1], [0], [0], [1], [0, 0, 1, 1], [], []>} : vector<16x16xf32>, vector<16x8xf32>, vector<16x8xf32> -> vector<16x8xf32>
    %32 = vector.extract_strided_slice %15 {offsets = [0, 0], sizes = [8, 32], strides = [1, 1]} : vector<32x32xf32> to vector<8x32xf32>
    %cst_13 = arith.constant dense<0.000000e+00> : vector<16x32xf32>
    %33 = tpu.matmul %31, %32, %cst_13 {dimension_numbers = #tpu.dot_dimension_numbers<[1], [0], [0], [1], [0, 0, 1, 1], [], []>} : vector<16x8xf32>, vector<8x32xf32>, vector<16x32xf32> -> vector<16x32xf32>
    %34 = vector.extract_strided_slice %14 {offsets = [0, 8], sizes = [16, 8], strides = [1, 1]} : vector<16x96xf32> to vector<16x8xf32>
    %35 = vector.extract_strided_slice %14 {offsets = [0, 40], sizes = [16, 8], strides = [1, 1]} : vector<16x96xf32> to vector<16x8xf32>
    %36 = vector.extract_strided_slice %14 {offsets = [0, 72], sizes = [16, 8], strides = [1, 1]} : vector<16x96xf32> to vector<16x8xf32>
    %cst_14 = arith.constant dense<0.000000e+00> : vector<16x16xf32>
    %37 = tpu.matmul %34, %35, %cst_14 {dimension_numbers = #tpu.dot_dimension_numbers<[1], [1], [0], [0], [0, 0, 1, 0], [], []>} : vector<16x8xf32>, vector<16x8xf32>, vector<16x16xf32> -> vector<16x16xf32>
    %38 = arith.addf %37, %1 : vector<16x16xf32>
    %cst_15 = arith.constant dense<0xFF800000> : vector<16xf32>
    %39 = vector.multi_reduction <maximumf>, %38, %cst_15 [1] : vector<16x16xf32> to vector<16xf32>
    %40 = vector.shape_cast %39 : vector<16xf32> to vector<16x1xf32>
    %41 = vector.broadcast %40 : vector<16x1xf32> to vector<16x16xf32>
    %42 = arith.subf %38, %41 : vector<16x16xf32>
    %43 = math.exp %42 : vector<16x16xf32>
    %cst_16 = arith.constant dense<0.000000e+00> : vector<16xf32>
    %44 = vector.multi_reduction <add>, %43, %cst_16 [1] : vector<16x16xf32> to vector<16xf32>
    %45 = vector.shape_cast %44 : vector<16xf32> to vector<16x1xf32>
    %46 = tpu.reciprocal %45 {approx = true} : vector<16x1xf32> -> vector<16x1xf32>
    %47 = vector.broadcast %46 : vector<16x1xf32> to vector<16x16xf32>
    %48 = arith.mulf %43, %47 : vector<16x16xf32>
    %cst_17 = arith.constant dense<0.000000e+00> : vector<16x8xf32>
    %49 = tpu.matmul %48, %36, %cst_17 {dimension_numbers = #tpu.dot_dimension_numbers<[1], [0], [0], [1], [0, 0, 1, 1], [], []>} : vector<16x16xf32>, vector<16x8xf32>, vector<16x8xf32> -> vector<16x8xf32>
    %50 = vector.extract_strided_slice %15 {offsets = [8, 0], sizes = [8, 32], strides = [1, 1]} : vector<32x32xf32> to vector<8x32xf32>
    %cst_18 = arith.constant dense<0.000000e+00> : vector<16x32xf32>
    %51 = tpu.matmul %49, %50, %cst_18 {dimension_numbers = #tpu.dot_dimension_numbers<[1], [0], [0], [1], [0, 0, 1, 1], [], []>} : vector<16x8xf32>, vector<8x32xf32>, vector<16x32xf32> -> vector<16x32xf32>
    %52 = arith.addf %33, %51 : vector<16x32xf32>
    %53 = vector.extract_strided_slice %14 {offsets = [0, 16], sizes = [16, 8], strides = [1, 1]} : vector<16x96xf32> to vector<16x8xf32>
    %54 = vector.extract_strided_slice %14 {offsets = [0, 48], sizes = [16, 8], strides = [1, 1]} : vector<16x96xf32> to vector<16x8xf32>
    %55 = vector.extract_strided_slice %14 {offsets = [0, 80], sizes = [16, 8], strides = [1, 1]} : vector<16x96xf32> to vector<16x8xf32>
    %cst_19 = arith.constant dense<0.000000e+00> : vector<16x16xf32>
    %56 = tpu.matmul %53, %54, %cst_19 {dimension_numbers = #tpu.dot_dimension_numbers<[1], [1], [0], [0], [0, 0, 1, 0], [], []>} : vector<16x8xf32>, vector<16x8xf32>, vector<16x16xf32> -> vector<16x16xf32>
    %57 = arith.addf %56, %1 : vector<16x16xf32>
    %cst_20 = arith.constant dense<0xFF800000> : vector<16xf32>
    %58 = vector.multi_reduction <maximumf>, %57, %cst_20 [1] : vector<16x16xf32> to vector<16xf32>
    %59 = vector.shape_cast %58 : vector<16xf32> to vector<16x1xf32>
    %60 = vector.broadcast %59 : vector<16x1xf32> to vector<16x16xf32>
    %61 = arith.subf %57, %60 : vector<16x16xf32>
    %62 = math.exp %61 : vector<16x16xf32>
    %cst_21 = arith.constant dense<0.000000e+00> : vector<16xf32>
    %63 = vector.multi_reduction <add>, %62, %cst_21 [1] : vector<16x16xf32> to vector<16xf32>
    %64 = vector.shape_cast %63 : vector<16xf32> to vector<16x1xf32>
    %65 = tpu.reciprocal %64 {approx = true} : vector<16x1xf32> -> vector<16x1xf32>
    %66 = vector.broadcast %65 : vector<16x1xf32> to vector<16x16xf32>
    %67 = arith.mulf %62, %66 : vector<16x16xf32>
    %cst_22 = arith.constant dense<0.000000e+00> : vector<16x8xf32>
    %68 = tpu.matmul %67, %55, %cst_22 {dimension_numbers = #tpu.dot_dimension_numbers<[1], [0], [0], [1], [0, 0, 1, 1], [], []>} : vector<16x16xf32>, vector<16x8xf32>, vector<16x8xf32> -> vector<16x8xf32>
    %69 = vector.extract_strided_slice %15 {offsets = [16, 0], sizes = [8, 32], strides = [1, 1]} : vector<32x32xf32> to vector<8x32xf32>
    %cst_23 = arith.constant dense<0.000000e+00> : vector<16x32xf32>
    %70 = tpu.matmul %68, %69, %cst_23 {dimension_numbers = #tpu.dot_dimension_numbers<[1], [0], [0], [1], [0, 0, 1, 1], [], []>} : vector<16x8xf32>, vector<8x32xf32>, vector<16x32xf32> -> vector<16x32xf32>
    %71 = arith.addf %52, %70 : vector<16x32xf32>
    %72 = vector.extract_strided_slice %14 {offsets = [0, 24], sizes = [16, 8], strides = [1, 1]} : vector<16x96xf32> to vector<16x8xf32>
    %73 = vector.extract_strided_slice %14 {offsets = [0, 56], sizes = [16, 8], strides = [1, 1]} : vector<16x96xf32> to vector<16x8xf32>
    %74 = vector.extract_strided_slice %14 {offsets = [0, 88], sizes = [16, 8], strides = [1, 1]} : vector<16x96xf32> to vector<16x8xf32>
    %cst_24 = arith.constant dense<0.000000e+00> : vector<16x16xf32>
    %75 = tpu.matmul %72, %73, %cst_24 {dimension_numbers = #tpu.dot_dimension_numbers<[1], [1], [0], [0], [0, 0, 1, 0], [], []>} : vector<16x8xf32>, vector<16x8xf32>, vector<16x16xf32> -> vector<16x16xf32>
    %76 = arith.addf %75, %1 : vector<16x16xf32>
    %cst_25 = arith.constant dense<0xFF800000> : vector<16xf32>
    %77 = vector.multi_reduction <maximumf>, %76, %cst_25 [1] : vector<16x16xf32> to vector<16xf32>
    %78 = vector.shape_cast %77 : vector<16xf32> to vector<16x1xf32>
    %79 = vector.broadcast %78 : vector<16x1xf32> to vector<16x16xf32>
    %80 = arith.subf %76, %79 : vector<16x16xf32>
    %81 = math.exp %80 : vector<16x16xf32>
    %cst_26 = arith.constant dense<0.000000e+00> : vector<16xf32>
    %82 = vector.multi_reduction <add>, %81, %cst_26 [1] : vector<16x16xf32> to vector<16xf32>
    %83 = vector.shape_cast %82 : vector<16xf32> to vector<16x1xf32>
    %84 = tpu.reciprocal %83 {approx = true} : vector<16x1xf32> -> vector<16x1xf32>
    %85 = vector.broadcast %84 : vector<16x1xf32> to vector<16x16xf32>
    %86 = arith.mulf %81, %85 : vector<16x16xf32>
    %cst_27 = arith.constant dense<0.000000e+00> : vector<16x8xf32>
    %87 = tpu.matmul %86, %74, %cst_27 {dimension_numbers = #tpu.dot_dimension_numbers<[1], [0], [0], [1], [0, 0, 1, 1], [], []>} : vector<16x16xf32>, vector<16x8xf32>, vector<16x8xf32> -> vector<16x8xf32>
    %88 = vector.extract_strided_slice %15 {offsets = [24, 0], sizes = [8, 32], strides = [1, 1]} : vector<32x32xf32> to vector<8x32xf32>
    %cst_28 = arith.constant dense<0.000000e+00> : vector<16x32xf32>
    %89 = tpu.matmul %87, %88, %cst_28 {dimension_numbers = #tpu.dot_dimension_numbers<[1], [0], [0], [1], [0, 0, 1, 1], [], []>} : vector<16x8xf32>, vector<8x32xf32>, vector<16x32xf32> -> vector<16x32xf32>
    %90 = arith.addf %71, %89 : vector<16x32xf32>
    %91 = vector.broadcast %4 : vector<1x32xf32> to vector<16x32xf32>
    %92 = arith.addf %90, %91 : vector<16x32xf32>
    %93 = arith.addf %0, %92 : vector<16x32xf32>
    %cst_29 = arith.constant dense<0.000000e+00> : vector<16xf32>
    %94 = vector.multi_reduction <add>, %93, %cst_29 [1] : vector<16x32xf32> to vector<16xf32>
    %95 = vector.shape_cast %94 : vector<16xf32> to vector<16x1xf32>
    %cst_30 = arith.constant 3.200000e+01 : f32
    %96 = vector.broadcast %cst_30 : f32 to vector<16x1xf32>
    %97 = arith.divf %95, %96 : vector<16x1xf32>
    %98 = vector.broadcast %97 : vector<16x1xf32> to vector<16x32xf32>
    %99 = arith.subf %93, %98 : vector<16x32xf32>
    %100 = arith.mulf %99, %99 : vector<16x32xf32>
    %cst_31 = arith.constant dense<0.000000e+00> : vector<16xf32>
    %101 = vector.multi_reduction <add>, %100, %cst_31 [1] : vector<16x32xf32> to vector<16xf32>
    %102 = vector.shape_cast %101 : vector<16xf32> to vector<16x1xf32>
    %cst_32 = arith.constant 3.200000e+01 : f32
    %103 = vector.broadcast %cst_32 : f32 to vector<16x1xf32>
    %104 = arith.divf %102, %103 : vector<16x1xf32>
    %105 = vector.broadcast %97 : vector<16x1xf32> to vector<16x32xf32>
    %106 = arith.subf %93, %105 : vector<16x32xf32>
    %cst_33 = arith.constant 9.99999974E-6 : f32
    %107 = vector.broadcast %cst_33 : f32 to vector<16x1xf32>
    %108 = arith.addf %104, %107 : vector<16x1xf32>
    %109 = math.rsqrt %108 : vector<16x1xf32>
    %110 = vector.broadcast %109 : vector<16x1xf32> to vector<16x32xf32>
    %111 = arith.mulf %106, %110 : vector<16x32xf32>
    %112 = vector.broadcast %5 : vector<1x32xf32> to vector<16x32xf32>
    %113 = arith.mulf %111, %112 : vector<16x32xf32>
    %114 = vector.broadcast %6 : vector<1x32xf32> to vector<16x32xf32>
    %115 = arith.addf %113, %114 : vector<16x32xf32>
    %c0_34 = arith.constant 0 : index
    %c0_35 = arith.constant 0 : index
    %116 = vector.load %arg5[%c0_34, %c0_35] : memref<32x128xf32, #tpu.memory_space<vmem>>, vector<32x128xf32>
    %cst_36 = arith.constant dense<0.000000e+00> : vector<16x128xf32>
    %117 = tpu.matmul %115, %116, %cst_36 {dimension_numbers = #tpu.dot_dimension_numbers<[1], [0], [0], [1], [0, 0, 1, 1], [], []>} : vector<16x32xf32>, vector<32x128xf32>, vector<16x128xf32> -> vector<16x128xf32>
    %118 = vector.broadcast %7 : vector<1x128xf32> to vector<16x128xf32>
    %119 = arith.addf %117, %118 : vector<16x128xf32>
    %cst_37 = arith.constant 0.000000e+00 : f32
    %120 = vector.broadcast %cst_37 : f32 to vector<16x128xf32>
    %121 = arith.maximumf %119, %120 : vector<16x128xf32>
    %c0_38 = arith.constant 0 : index
    %c0_39 = arith.constant 0 : index
    %122 = vector.load %arg6[%c0_38, %c0_39] : memref<128x32xf32, #tpu.memory_space<vmem>>, vector<128x32xf32>
    %cst_40 = arith.constant dense<0.000000e+00> : vector<16x32xf32>
    %123 = tpu.matmul %121, %122, %cst_40 {dimension_numbers = #tpu.dot_dimension_numbers<[1], [0], [0], [1], [0, 0, 1, 1], [], []>} : vector<16x128xf32>, vector<128x32xf32>, vector<16x32xf32> -> vector<16x32xf32>
    %124 = vector.broadcast %8 : vector<1x32xf32> to vector<16x32xf32>
    %125 = arith.addf %123, %124 : vector<16x32xf32>
    %126 = arith.addf %115, %125 : vector<16x32xf32>
    %cst_41 = arith.constant dense<0.000000e+00> : vector<16xf32>
    %127 = vector.multi_reduction <add>, %126, %cst_41 [1] : vector<16x32xf32> to vector<16xf32>
    %128 = vector.shape_cast %127 : vector<16xf32> to vector<16x1xf32>
    %cst_42 = arith.constant 3.200000e+01 : f32
    %129 = vector.broadcast %cst_42 : f32 to vector<16x1xf32>
    %130 = arith.divf %128, %129 : vector<16x1xf32>
    %131 = vector.broadcast %130 : vector<16x1xf32> to vector<16x32xf32>
    %132 = arith.subf %126, %131 : vector<16x32xf32>
    %133 = arith.mulf %132, %132 : vector<16x32xf32>
    %cst_43 = arith.constant dense<0.000000e+00> : vector<16xf32>
    %134 = vector.multi_reduction <add>, %133, %cst_43 [1] : vector<16x32xf32> to vector<16xf32>
    %135 = vector.shape_cast %134 : vector<16xf32> to vector<16x1xf32>
    %cst_44 = arith.constant 3.200000e+01 : f32
    %136 = vector.broadcast %cst_44 : f32 to vector<16x1xf32>
    %137 = arith.divf %135, %136 : vector<16x1xf32>
    %138 = vector.broadcast %130 : vector<16x1xf32> to vector<16x32xf32>
    %139 = arith.subf %126, %138 : vector<16x32xf32>
    %cst_45 = arith.constant 9.99999974E-6 : f32
    %140 = vector.broadcast %cst_45 : f32 to vector<16x1xf32>
    %141 = arith.addf %137, %140 : vector<16x1xf32>
    %142 = math.rsqrt %141 : vector<16x1xf32>
    %143 = vector.broadcast %142 : vector<16x1xf32> to vector<16x32xf32>
    %144 = arith.mulf %139, %143 : vector<16x32xf32>
    %145 = vector.broadcast %9 : vector<1x32xf32> to vector<16x32xf32>
    %146 = arith.mulf %144, %145 : vector<16x32xf32>
    %147 = vector.broadcast %10 : vector<1x32xf32> to vector<16x32xf32>
    %148 = arith.addf %146, %147 : vector<16x32xf32>
    %c0_46 = arith.constant 0 : index
    %c0_47 = arith.constant 0 : index
    %149 = vector.load %arg8[%c0_46, %c0_47] : memref<16x32xf32, #tpu.memory_space<vmem>>, vector<16x32xf32>
    tpu.vector_store %arg8[%c0_46, %c0_47], %148 {strides = array<i32>} : memref<16x32xf32, #tpu.memory_space<vmem>>, vector<16x32xf32>,
    return
  }
  func.func @transform_0(%arg0: i32) -> (i32, i32) {
    %c0_i32 = arith.constant 0 : i32
    %c0_i32_0 = arith.constant 0 : i32
    %c0_i32_1 = arith.constant 0 : i32
    return %c0_i32, %c0_i32_0 : i32, i32
  }
  func.func @transform_1(%arg0: i32) -> (i32, i32) {
    %c0_i32 = arith.constant 0 : i32
    %c0_i32_0 = arith.constant 0 : i32
    %c0_i32_1 = arith.constant 0 : i32
    return %c0_i32, %c0_i32_0 : i32, i32
  }
  func.func @transform_2(%arg0: i32) -> (i32, i32) {
    %c0_i32 = arith.constant 0 : i32
    %c0_i32_0 = arith.constant 0 : i32
    %c0_i32_1 = arith.constant 0 : i32
    return %c0_i32, %c0_i32_0 : i32, i32
  }
  func.func @transform_3(%arg0: i32) -> (i32, i32) {
    %c0_i32 = arith.constant 0 : i32
    %c0_i32_0 = arith.constant 0 : i32
    %c0_i32_1 = arith.constant 0 : i32
    return %c0_i32, %c0_i32_0 : i32, i32
  }
  func.func @transform_4(%arg0: i32) -> (i32, i32) {
    %c0_i32 = arith.constant 0 : i32
    %c0_i32_0 = arith.constant 0 : i32
    %c0_i32_1 = arith.constant 0 : i32
    return %c0_i32, %c0_i32_0 : i32, i32
  }
  func.func @transform_5(%arg0: i32) -> (i32, i32) {
    %c0_i32 = arith.constant 0 : i32
    %c0_i32_0 = arith.constant 0 : i32
    %c0_i32_1 = arith.constant 0 : i32
    return %c0_i32, %c0_i32_0 : i32, i32
  }
  func.func @transform_6(%arg0: i32) -> (i32, i32) {
    %c0_i32 = arith.constant 0 : i32
    %c0_i32_0 = arith.constant 0 : i32
    %c0_i32_1 = arith.constant 0 : i32
    return %c0_i32, %c0_i32_0 : i32, i32
  }
  func.func @transform_7(%arg0: i32) -> (i32, i32) {
    %c0_i32 = arith.constant 0 : i32
    %c0_i32_0 = arith.constant 0 : i32
    %c0_i32_1 = arith.constant 0 : i32
    return %c0_i32, %c0_i32_0 : i32, i32
  }
}

</mosaic_0001>

<llo_original>
// kernel: tpu_custom_call.1
$region0: #{tpu_custom_call.1}
  #allocation0 [shape = 'u32[]', space=smem, size = 0x4, offset = 0x4, fixed_abs, tag = 'smem constant byte address 0x4 - core index']
  #allocation1 [shape = 'u32[144,128]{1,0:T(1,128)}', space=vmem, size = 0x12000, scoped, tag = 'internal scratch']
  %s0 = inlined_call_operand.vmem [shape: f32[16,32], index: 0, kind: input, shape index: {}]
  %s1 = inlined_call_operand.vmem [shape: f32[16,16], index: 1, kind: input, shape index: {}]
  %s2 = inlined_call_operand.vmem [shape: f32[32,96], index: 2, kind: input, shape index: {}]
  %s3 = inlined_call_operand.vmem [shape: f32[32,32], index: 3, kind: input, shape index: {}]
  %s4 = inlined_call_operand.vmem [shape: f32[32,128], index: 4, kind: input, shape index: {}]
  %s5 = inlined_call_operand.vmem [shape: f32[128,32], index: 5, kind: input, shape index: {}]
  %s6 = inlined_call_operand.vmem [shape: f32[8,128], index: 6, kind: input, shape index: {}]
  %s7 = inlined_call_operand.hbm [shape: f32[16,32], index: 7, kind: output, shape index: {}]
  %s8 = sld [smem:[#allocation0]]
  $region38: #{tpu_custom_call.1} parent=0
    _
  %s10 = ssub.s32 1, %s8
  %s11 = scalar_select 0, %s10, %s8
  $region1: #{tpu_custom_call.1} parent=0
    #allocation2 [shape = 'u8[8192]{0}', space=vmem, size = 0x2000, scoped, tag = 'output window, operand 0, single buffered']
    #allocation3 [shape = 's32[1]{0}', space=sflag, size = 0x4, scoped, tag = 'scoped memory for tpu_custom_call.1']
    %12 = vsyncpa [#allocation3], 0
    // Predicated region
    $region2: #{tpu_custom_call.1} parent=1 // pred_check
      _
    $region3: #{tpu_custom_call.1} parent=1 // pred_check_branch
      %14 = sbr.rel (0) target = $region5
    $region4: #{tpu_custom_call.1} parent=1 // pred_region
      _
    $region5: #{tpu_custom_call.1} parent=1 // pred_fallthru
      _
    // Predicated region
    $region6: #{tpu_custom_call.1} parent=1 // pred_check
      _
    $region7: #{tpu_custom_call.1} parent=1 // pred_check_branch
      %16 = sbr.rel (0) target = $region9
    $region8: #{tpu_custom_call.1} parent=1 // pred_region
      _
    $region9: #{tpu_custom_call.1} parent=1 // pred_fallthru
      _
    // Predicated region
    $region10: #{tpu_custom_call.1} parent=1 // pred_check
      _
    $region11: #{tpu_custom_call.1} parent=1 // pred_check_branch
      %18 = sbr.rel (0) target = $region13
    $region12: #{tpu_custom_call.1} parent=1 // pred_region
      _
    $region13: #{tpu_custom_call.1} parent=1 // pred_fallthru
      _
    // Predicated region
    $region14: #{tpu_custom_call.1} parent=1 // pred_check
      _
    $region15: #{tpu_custom_call.1} parent=1 // pred_check_branch
      %20 = sbr.rel (0) target = $region17
    $region16: #{tpu_custom_call.1} parent=1 // pred_region
      _
    $region17: #{tpu_custom_call.1} parent=1 // pred_fallthru
      _
    // Predicated region
    $region18: #{tpu_custom_call.1} parent=1 // pred_check
      _
    $region19: #{tpu_custom_call.1} parent=1 // pred_check_branch
      %22 = sbr.rel (0) target = $region21
    $region20: #{tpu_custom_call.1} parent=1 // pred_region
      _
    $region21: #{tpu_custom_call.1} parent=1 // pred_fallthru
      _
    // Predicated region
    $region22: #{tpu_custom_call.1} parent=1 // pred_check
      _
    $region23: #{tpu_custom_call.1} parent=1 // pred_check_branch
      %24 = sbr.rel (0) target = $region25
    $region24: #{tpu_custom_call.1} parent=1 // pred_region
      _
    $region25: #{tpu_custom_call.1} parent=1 // pred_fallthru
      _
    // Predicated region
    $region26: #{tpu_custom_call.1} parent=1 // pred_check
      _
    $region27: #{tpu_custom_call.1} parent=1 // pred_check_branch
      %26 = sbr.rel (0) target = $region29
    $region28: #{tpu_custom_call.1} parent=1 // pred_region
      _
    $region29: #{tpu_custom_call.1} parent=1 // pred_fallthru
      _
    %v27 = vld [vmem:[%s0] sm:$0xff]
    %v28 = vld [vmem:[%s0 + $0x8] sm:$0xff]
    %v29 = vld [vmem:[%s1] sm:$0xff]
    %v30 = vld [vmem:[%s1 + $0x8] sm:$0xff]
    %v31 = vld [vmem:[%s6] sm:$0xff]
    %v32 = vld [vmem:[%s2] sm:$0xff]
    %v33 = vld [vmem:[%s2 + $0x8] sm:$0xff]
    %v34 = vld [vmem:[%s2 + $0x10] sm:$0xff]
    %v35 = vld [vmem:[%s2 + $0x18] sm:$0xff]
    %v36 = vlaneseq
    %v37 = vshrl.u32 %v36, 7
    %v38 = vsub.s32 0, %v37
    %v39 = vrot.slane %v31, %v38
    %vm40 = vcmask 261120
    %v42 = vsel %vm40, %v27, 0
    %v45 = vsel %vm40, %v28, 0
    %47 = vmatprep.subr.mxu0 0.0
    %48 = vmatpush1.msra.mxu0 0.0
    %49 = vmatprep.subr.mxu0 0.0
    %50 = vmatpush1.msra.mxu0 0.0
    %51 = vmatprep.subr.mxu0 0.0
    %52 = vmatpush1.msra.mxu0 0.0
    %53 = vmatprep.subr.mxu0 0.0
    %54 = vmatpush1.msra.mxu0 0.0
    %55 = vmatprep.subr.mxu0 0.0
    %56 = vmatpush1.msra.mxu0 0.0
    %57 = vmatprep.subr.mxu0 0.0
    %58 = vmatpush1.msra.mxu0 0.0
    %59 = vmatprep.subr.mxu0 0.0
    %60 = vmatpush1.msra.mxu0 0.0
    %61 = vmatprep.subr.mxu0 0.0
    %62 = vmatpush1.msra.mxu0 0.0
    %63 = vmatprep.subr.mxu0 0.0
    %64 = vmatpush1.msra.mxu0 0.0
    %65 = vmatprep.subr.mxu0 0.0
    %66 = vmatpush1.msra.mxu0 0.0
    %67 = vmatprep.subr.mxu0 0.0
    %68 = vmatpush1.msra.mxu0 0.0
    %69 = vmatprep.subr.mxu0 0.0
    %70 = vmatpush1.msra.mxu0 0.0
    %71 = vmatprep.subr.mxu0 0.0
    %72 = vmatpush1.msra.mxu0 %v35
    %73 = vmatprep.subr.mxu0 0.0
    %74 = vmatpush1.msra.mxu0 %v34
    %75 = vmatprep.subr.mxu0 0.0
    %76 = vmatpush1.msra.mxu0 %v33
    %77 = vmatprep.subr.mxu0 0.0
    %78 = vmatpush1.msra.mxu0 %v32
    %79 = vmatprep.subr.mxu0 0.0
    %80 = vmatpush2.msra.mxu0 0.0
    %81 = vmatprep.subr.mxu0 0.0
    %82 = vmatpush2.msra.mxu0 0.0
    %83 = vmatprep.subr.mxu0 0.0
    %84 = vmatpush2.msra.mxu0 0.0
    %85 = vmatprep.subr.mxu0 0.0
    %86 = vmatpush2.msra.mxu0 0.0
    %87 = vmatprep.subr.mxu0 0.0
    %88 = vmatpush2.msra.mxu0 0.0
    %89 = vmatprep.subr.mxu0 0.0
    %90 = vmatpush2.msra.mxu0 0.0
    %91 = vmatprep.subr.mxu0 0.0
    %92 = vmatpush2.msra.mxu0 0.0
    %93 = vmatprep.subr.mxu0 0.0
    %94 = vmatpush2.msra.mxu0 0.0
    %95 = vmatprep.subr.mxu0 0.0
    %96 = vmatpush2.msra.mxu0 0.0
    %97 = vmatprep.subr.mxu0 0.0
    %98 = vmatpush2.msra.mxu0 0.0
    %99 = vmatprep.subr.mxu0 0.0
    %100 = vmatpush2.msra.mxu0 0.0
    %101 = vmatprep.subr.mxu0 0.0
    %102 = vmatpush2.msra.mxu0 0.0
    %103 = vmatprep.subr.mxu0 0.0
    %104 = vmatpush2.msra.mxu0 0.0
    %105 = vmatprep.subr.mxu0 0.0
    %106 = vmatpush2.msra.mxu0 0.0
    %107 = vmatprep.subr.mxu0 0.0
    %108 = vmatpush2.msra.mxu0 0.0
    %109 = vmatprep.subr.mxu0 0.0
    %110 = vmatpush2.msra.mxu0 0.0
    %111 = vmatprep.mubr.f32.mxu0 0.0
    %112 = vmatmul.mubr.f32.gmra.mxu0 %v42
    %v113 = vpop.f32.mrf.mxu0
    %v114 = vadd.f32 %v39, %v113
    %v115 = vpop.f32.mrf.mxu0
    %116 = vmatprep.mubr.f32.mxu0 0.0
    %117 = vmatmul.mubr.f32.gmra.mxu0 %v45
    %v118 = vpop.f32.mrf.mxu0
    %v119 = vadd.f32 %v39, %v118
    %v120 = vpop.f32.mrf.mxu0
    %121 = vdwg.mxu0
    %v122 = vld [vmem:[%s3] sm:$0xff]
    %v123 = vld [vmem:[%s3 + $0x8] sm:$0xff]
    %v124 = vld [vmem:[%s3 + $0x10] sm:$0xff]
    %v125 = vld [vmem:[%s3 + $0x18] sm:$0xff]
    %128 = vrot.lane.b32.xlu0 %v114, 96
    %v129 = vpop.permute.xlu0 %128
    %130 = vrot.lane.b32.xlu0 %v119, 96
    %v131 = vpop.permute.xlu0 %130
    %vm132 = vcmask 64512
    %v133 = vsel %vm132, %v114, 0
    %v135 = vsel %vm132, %v119, 0
    %v137 = vsel %vm132, %v129, 0
    %v139 = vsel %vm132, %v131, 0
    %141 = vmatprep.subr.mxu0 0.0
    %142 = vmatpush1.xpose.msra.mxu0 0.0
    %143 = vmatprep.subr.mxu0 0.0
    %144 = vmatpush1.xpose.msra.mxu0 0.0
    %145 = vmatprep.subr.mxu0 0.0
    %146 = vmatpush1.xpose.msra.mxu0 0.0
    %147 = vmatprep.subr.mxu0 0.0
    %148 = vmatpush1.xpose.msra.mxu0 0.0
    %149 = vmatprep.subr.mxu0 0.0
    %150 = vmatpush1.xpose.msra.mxu0 0.0
    %151 = vmatprep.subr.mxu0 0.0
    %152 = vmatpush1.xpose.msra.mxu0 0.0
    %153 = vmatprep.subr.mxu0 0.0
    %154 = vmatpush1.xpose.msra.mxu0 0.0
    %155 = vmatprep.subr.mxu0 0.0
    %156 = vmatpush1.xpose.msra.mxu0 0.0
    %157 = vmatprep.subr.mxu0 0.0
    %158 = vmatpush1.xpose.msra.mxu0 0.0
    %159 = vmatprep.subr.mxu0 0.0
    %160 = vmatpush1.xpose.msra.mxu0 0.0
    %161 = vmatprep.subr.mxu0 0.0
    %162 = vmatpush1.xpose.msra.mxu0 0.0
    %163 = vmatprep.subr.mxu0 0.0
    %164 = vmatpush1.xpose.msra.mxu0 0.0
    %165 = vmatprep.subr.mxu0 0.0
    %166 = vmatpush1.xpose.msra.mxu0 0.0
    %167 = vmatprep.subr.mxu0 0.0
    %168 = vmatpush1.xpose.msra.mxu0 0.0
    %169 = vmatprep.subr.mxu0 0.0
    %170 = vmatpush1.xpose.msra.mxu0 %v139
    %171 = vmatprep.subr.mxu0 0.0
    %172 = vmatpush1.xpose.msra.mxu0 %v137
    %173 = vmatprep.subr.mxu0 0.0
    %174 = vmatpush2.xpose.msra.mxu0 0.0
    %175 = vmatprep.subr.mxu0 0.0
    %176 = vmatpush2.xpose.msra.mxu0 0.0
    %177 = vmatprep.subr.mxu0 0.0
    %178 = vmatpush2.xpose.msra.mxu0 0.0
    %179 = vmatprep.subr.mxu0 0.0
    %180 = vmatpush2.xpose.msra.mxu0 0.0
    %181 = vmatprep.subr.mxu0 0.0
    %182 = vmatpush2.xpose.msra.mxu0 0.0
    %183 = vmatprep.subr.mxu0 0.0
    %184 = vmatpush2.xpose.msra.mxu0 0.0
    %185 = vmatprep.subr.mxu0 0.0
    %186 = vmatpush2.xpose.msra.mxu0 0.0
    %187 = vmatprep.subr.mxu0 0.0
    %188 = vmatpush2.xpose.msra.mxu0 0.0
    %189 = vmatprep.subr.mxu0 0.0
    %190 = vmatpush2.xpose.msra.mxu0 0.0
    %191 = vmatprep.subr.mxu0 0.0
    %192 = vmatpush2.xpose.msra.mxu0 0.0
    %193 = vmatprep.subr.mxu0 0.0
    %194 = vmatpush2.xpose.msra.mxu0 0.0
    %195 = vmatprep.subr.mxu0 0.0
    %196 = vmatpush2.xpose.msra.mxu0 0.0
    %197 = vmatprep.subr.mxu0 0.0
    %198 = vmatpush2.xpose.msra.mxu0 0.0
    %199 = vmatprep.subr.mxu0 0.0
    %200 = vmatpush2.xpose.msra.mxu0 0.0
    %201 = vmatprep.subr.mxu0 0.0
    %202 = vmatpush2.xpose.msra.mxu0 0.0
    %203 = vmatprep.subr.mxu0 0.0
    %204 = vmatpush2.xpose.msra.mxu0 0.0
    %205 = vmatprep.mubr.f32.mxu0 0.0
    %206 = vmatmul.mubr.f32.gmra.mxu0 %v133
    %v207 = vpop.f32.mrf.mxu0
    %v208 = vadd.f32 %v29, %v207
    %v209 = vpop.f32.mrf.mxu0
    %210 = vmatprep.mubr.f32.mxu0 0.0
    %211 = vmatmul.mubr.f32.gmra.mxu0 %v135
    %v212 = vpop.f32.mrf.mxu0
    %v213 = vadd.f32 %v30, %v212
    %v214 = vpop.f32.mrf.mxu0
    %215 = vdwg.mxu0
    %vm216 = vcmask 130048
    %v217 = vsel %vm216, %v208, -inf
    %218 = vmax.xlane.f32.xlu0 %v217
    %v219 = vpop.xlane.xlu0 %218
    %v220 = vsel %vm216, %v213, -inf
    %221 = vmax.xlane.f32.xlu0 %v220
    %v222 = vpop.xlane.xlu0 %221
    %v223 = vsub.f32 %v208, %v219
    %v224 = vsub.f32 %v213, %v222
    %v225 = vmul.f32 %v223, 1.442695
    %v226 = vpow.pop %v225
    %v227 = vmul.f32 %v224, 1.442695
    %v228 = vpow.pop %v227
    %v229 = vsel %vm216, %v226, 0.0
    %230 = vadd.xlane.f32.xlu0 %v229
    %v231 = vpop.xlane.xlu0 %230
    %v232 = vsel %vm216, %v228, 0.0
    %233 = vadd.xlane.f32.xlu0 %v232
    %v234 = vpop.xlane.xlu0 %233
    %v235 = vrcp.pop %v231
    %v236 = vrcp.pop %v234
    %v237 = vmul.f32 %v226, %v235
    %v238 = vmul.f32 %v228, %v236
    %239 = vrot.lane.b32.xlu0 %v114, 64
    %v240 = vpop.permute.xlu0 %239
    %241 = vrot.lane.b32.xlu0 %v119, 64
    %v242 = vpop.permute.xlu0 %241
    %v246 = vsel %vm216, %v237, 0
    %v249 = vsel %vm216, %v238, 0
    %251 = vmatprep.subr.mxu0 0.0
    %252 = vmatpush1.msra.mxu0 0.0
    %253 = vmatprep.subr.mxu0 0.0
    %254 = vmatpush1.msra.mxu0 0.0
    %255 = vmatprep.subr.mxu0 0.0
    %256 = vmatpush1.msra.mxu0 0.0
    %257 = vmatprep.subr.mxu0 0.0
    %258 = vmatpush1.msra.mxu0 0.0
    %259 = vmatprep.subr.mxu0 0.0
    %260 = vmatpush1.msra.mxu0 0.0
    %261 = vmatprep.subr.mxu0 0.0
    %262 = vmatpush1.msra.mxu0 0.0
    %263 = vmatprep.subr.mxu0 0.0
    %264 = vmatpush1.msra.mxu0 0.0
    %265 = vmatprep.subr.mxu0 0.0
    %266 = vmatpush1.msra.mxu0 0.0
    %267 = vmatprep.subr.mxu0 0.0
    %268 = vmatpush1.msra.mxu0 0.0
    %269 = vmatprep.subr.mxu0 0.0
    %270 = vmatpush1.msra.mxu0 0.0
    %271 = vmatprep.subr.mxu0 0.0
    %272 = vmatpush1.msra.mxu0 0.0
    %273 = vmatprep.subr.mxu0 0.0
    %274 = vmatpush1.msra.mxu0 0.0
    %275 = vmatprep.subr.mxu0 0.0
    %276 = vmatpush1.msra.mxu0 0.0
    %277 = vmatprep.subr.mxu0 0.0
    %278 = vmatpush1.msra.mxu0 0.0
    %279 = vmatprep.subr.mxu0 0.0
    %280 = vmatpush1.msra.mxu0 %v242
    %281 = vmatprep.subr.mxu0 0.0
    %282 = vmatpush1.msra.mxu0 %v240
    %283 = vmatprep.subr.mxu0 0.0
    %284 = vmatpush2.msra.mxu0 0.0
    %285 = vmatprep.subr.mxu0 0.0
    %286 = vmatpush2.msra.mxu0 0.0
    %287 = vmatprep.subr.mxu0 0.0
    %288 = vmatpush2.msra.mxu0 0.0
    %289 = vmatprep.subr.mxu0 0.0
    %290 = vmatpush2.msra.mxu0 0.0
    %291 = vmatprep.subr.mxu0 0.0
    %292 = vmatpush2.msra.mxu0 0.0
    %293 = vmatprep.subr.mxu0 0.0
    %294 = vmatpush2.msra.mxu0 0.0
    %295 = vmatprep.subr.mxu0 0.0
    %296 = vmatpush2.msra.mxu0 0.0
    %297 = vmatprep.subr.mxu0 0.0
    %298 = vmatpush2.msra.mxu0 0.0
    %299 = vmatprep.subr.mxu0 0.0
    %300 = vmatpush2.msra.mxu0 0.0
    %301 = vmatprep.subr.mxu0 0.0
    %302 = vmatpush2.msra.mxu0 0.0
    %303 = vmatprep.subr.mxu0 0.0
    %304 = vmatpush2.msra.mxu0 0.0
    %305 = vmatprep.subr.mxu0 0.0
    %306 = vmatpush2.msra.mxu0 0.0
    %307 = vmatprep.subr.mxu0 0.0
    %308 = vmatpush2.msra.mxu0 0.0
    %309 = vmatprep.subr.mxu0 0.0
    %310 = vmatpush2.msra.mxu0 0.0
    %311 = vmatprep.subr.mxu0 0.0
    %312 = vmatpush2.msra.mxu0 0.0
    %313 = vmatprep.subr.mxu0 0.0
    %314 = vmatpush2.msra.mxu0 0.0
    %315 = vmatprep.mubr.f32.mxu0 0.0
    %316 = vmatmul.mubr.f32.gmra.mxu0 %v246
    %v317 = vpop.f32.mrf.mxu0
    %v318 = vadd.f32 0.0, %v317
    %v319 = vpop.f32.mrf.mxu0
    %320 = vmatprep.mubr.f32.mxu0 0.0
    %321 = vmatmul.mubr.f32.gmra.mxu0 %v249
    %v322 = vpop.f32.mrf.mxu0
    %v323 = vadd.f32 0.0, %v322
    %v324 = vpop.f32.mrf.mxu0
    %325 = vdwg.mxu0
    %326 = vrot.lane.b32.xlu0 %v114, 120
    %v327 = vpop.permute.xlu0 %326
    %328 = vrot.lane.b32.xlu0 %v119, 120
    %v329 = vpop.permute.xlu0 %328
    %330 = vrot.lane.b32.xlu0 %v114, 88
    %v331 = vpop.permute.xlu0 %330
    %332 = vrot.lane.b32.xlu0 %v119, 88
    %v333 = vpop.permute.xlu0 %332
    %v334 = vsel %vm132, %v327, 0
    %v336 = vsel %vm132, %v329, 0
    %v338 = vsel %vm132, %v331, 0
    %v340 = vsel %vm132, %v333, 0
    %342 = vmatprep.subr.mxu0 0.0
    %343 = vmatpush1.xpose.msra.mxu0 0.0
    %344 = vmatprep.subr.mxu0 0.0
    %345 = vmatpush1.xpose.msra.mxu0 0.0
    %346 = vmatprep.subr.mxu0 0.0
    %347 = vmatpush1.xpose.msra.mxu0 0.0
    %348 = vmatprep.subr.mxu0 0.0
    %349 = vmatpush1.xpose.msra.mxu0 0.0
    %350 = vmatprep.subr.mxu0 0.0
    %351 = vmatpush1.xpose.msra.mxu0 0.0
    %352 = vmatprep.subr.mxu0 0.0
    %353 = vmatpush1.xpose.msra.mxu0 0.0
    %354 = vmatprep.subr.mxu0 0.0
    %355 = vmatpush1.xpose.msra.mxu0 0.0
    %356 = vmatprep.subr.mxu0 0.0
    %357 = vmatpush1.xpose.msra.mxu0 0.0
    %358 = vmatprep.subr.mxu0 0.0
    %359 = vmatpush1.xpose.msra.mxu0 0.0
    %360 = vmatprep.subr.mxu0 0.0
    %361 = vmatpush1.xpose.msra.mxu0 0.0
    %362 = vmatprep.subr.mxu0 0.0
    %363 = vmatpush1.xpose.msra.mxu0 0.0
    %364 = vmatprep.subr.mxu0 0.0
    %365 = vmatpush1.xpose.msra.mxu0 0.0
    %366 = vmatprep.subr.mxu0 0.0
    %367 = vmatpush1.xpose.msra.mxu0 0.0
    %368 = vmatprep.subr.mxu0 0.0
    %369 = vmatpush1.xpose.msra.mxu0 0.0
    %370 = vmatprep.subr.mxu0 0.0
    %371 = vmatpush1.xpose.msra.mxu0 %v340
    %372 = vmatprep.subr.mxu0 0.0
    %373 = vmatpush1.xpose.msra.mxu0 %v338
    %374 = vmatprep.subr.mxu0 0.0
    %375 = vmatpush2.xpose.msra.mxu0 0.0
    %376 = vmatprep.subr.mxu0 0.0
    %377 = vmatpush2.xpose.msra.mxu0 0.0
    %378 = vmatprep.subr.mxu0 0.0
    %379 = vmatpush2.xpose.msra.mxu0 0.0
    %380 = vmatprep.subr.mxu0 0.0
    %381 = vmatpush2.xpose.msra.mxu0 0.0
    %382 = vmatprep.subr.mxu0 0.0
    %383 = vmatpush2.xpose.msra.mxu0 0.0
    %384 = vmatprep.subr.mxu0 0.0
    %385 = vmatpush2.xpose.msra.mxu0 0.0
    %386 = vmatprep.subr.mxu0 0.0
    %387 = vmatpush2.xpose.msra.mxu0 0.0
    %388 = vmatprep.subr.mxu0 0.0
    %389 = vmatpush2.xpose.msra.mxu0 0.0
    %390 = vmatprep.subr.mxu0 0.0
    %391 = vmatpush2.xpose.msra.mxu0 0.0
    %392 = vmatprep.subr.mxu0 0.0
    %393 = vmatpush2.xpose.msra.mxu0 0.0
    %394 = vmatprep.subr.mxu0 0.0
    %395 = vmatpush2.xpose.msra.mxu0 0.0
    %396 = vmatprep.subr.mxu0 0.0
    %397 = vmatpush2.xpose.msra.mxu0 0.0
    %398 = vmatprep.subr.mxu0 0.0
    %399 = vmatpush2.xpose.msra.mxu0 0.0
    %400 = vmatprep.subr.mxu0 0.0
    %401 = vmatpush2.xpose.msra.mxu0 0.0
    %402 = vmatprep.subr.mxu0 0.0
    %403 = vmatpush2.xpose.msra.mxu0 0.0
    %404 = vmatprep.subr.mxu0 0.0
    %405 = vmatpush2.xpose.msra.mxu0 0.0
    %406 = vmatprep.mubr.f32.mxu0 0.0
    %407 = vmatmul.mubr.f32.gmra.mxu0 %v334
    %v408 = vpop.f32.mrf.mxu0
    %v409 = vadd.f32 %v29, %v408
    %v410 = vpop.f32.mrf.mxu0
    %411 = vmatprep.mubr.f32.mxu0 0.0
    %412 = vmatmul.mubr.f32.gmra.mxu0 %v336
    %v413 = vpop.f32.mrf.mxu0
    %v414 = vadd.f32 %v30, %v413
    %v415 = vpop.f32.mrf.mxu0
    %416 = vdwg.mxu0
    %v417 = vsel %vm216, %v409, -inf
    %418 = vmax.xlane.f32.xlu0 %v417
    %v419 = vpop.xlane.xlu0 %418
    %v420 = vsel %vm216, %v414, -inf
    %421 = vmax.xlane.f32.xlu0 %v420
    %v422 = vpop.xlane.xlu0 %421
    %v423 = vsub.f32 %v409, %v419
    %v424 = vsub.f32 %v414, %v422
    %v425 = vmul.f32 %v423, 1.442695
    %v426 = vpow.pop %v425
    %v427 = vmul.f32 %v424, 1.442695
    %v428 = vpow.pop %v427
    %v429 = vsel %vm216, %v426, 0.0
    %430 = vadd.xlane.f32.xlu0 %v429
    %v431 = vpop.xlane.xlu0 %430
    %v432 = vsel %vm216, %v428, 0.0
    %433 = vadd.xlane.f32.xlu0 %v432
    %v434 = vpop.xlane.xlu0 %433
    %v435 = vrcp.pop %v431
    %v436 = vrcp.pop %v434
    %v437 = vmul.f32 %v426, %v435
    %v438 = vmul.f32 %v428, %v436
    %439 = vrot.lane.b32.xlu0 %v114, 56
    %v440 = vpop.permute.xlu0 %439
    %441 = vrot.lane.b32.xlu0 %v119, 56
    %v442 = vpop.permute.xlu0 %441
    %v446 = vsel %vm216, %v437, 0
    %v449 = vsel %vm216, %v438, 0
    %451 = vmatprep.subr.mxu0 0.0
    %452 = vmatpush1.msra.mxu0 0.0
    %453 = vmatprep.subr.mxu0 0.0
    %454 = vmatpush1.msra.mxu0 0.0
    %455 = vmatprep.subr.mxu0 0.0
    %456 = vmatpush1.msra.mxu0 0.0
    %457 = vmatprep.subr.mxu0 0.0
    %458 = vmatpush1.msra.mxu0 0.0
    %459 = vmatprep.subr.mxu0 0.0
    %460 = vmatpush1.msra.mxu0 0.0
    %461 = vmatprep.subr.mxu0 0.0
    %462 = vmatpush1.msra.mxu0 0.0
    %463 = vmatprep.subr.mxu0 0.0
    %464 = vmatpush1.msra.mxu0 0.0
    %465 = vmatprep.subr.mxu0 0.0
    %466 = vmatpush1.msra.mxu0 0.0
    %467 = vmatprep.subr.mxu0 0.0
    %468 = vmatpush1.msra.mxu0 0.0
    %469 = vmatprep.subr.mxu0 0.0
    %470 = vmatpush1.msra.mxu0 0.0
    %471 = vmatprep.subr.mxu0 0.0
    %472 = vmatpush1.msra.mxu0 0.0
    %473 = vmatprep.subr.mxu0 0.0
    %474 = vmatpush1.msra.mxu0 0.0
    %475 = vmatprep.subr.mxu0 0.0
    %476 = vmatpush1.msra.mxu0 0.0
    %477 = vmatprep.subr.mxu0 0.0
    %478 = vmatpush1.msra.mxu0 0.0
    %479 = vmatprep.subr.mxu0 0.0
    %480 = vmatpush1.msra.mxu0 %v442
    %481 = vmatprep.subr.mxu0 0.0
    %482 = vmatpush1.msra.mxu0 %v440
    %483 = vmatprep.subr.mxu0 0.0
    %484 = vmatpush2.msra.mxu0 0.0
    %485 = vmatprep.subr.mxu0 0.0
    %486 = vmatpush2.msra.mxu0 0.0
    %487 = vmatprep.subr.mxu0 0.0
    %488 = vmatpush2.msra.mxu0 0.0
    %489 = vmatprep.subr.mxu0 0.0
    %490 = vmatpush2.msra.mxu0 0.0
    %491 = vmatprep.subr.mxu0 0.0
    %492 = vmatpush2.msra.mxu0 0.0
    %493 = vmatprep.subr.mxu0 0.0
    %494 = vmatpush2.msra.mxu0 0.0
    %495 = vmatprep.subr.mxu0 0.0
    %496 = vmatpush2.msra.mxu0 0.0
    %497 = vmatprep.subr.mxu0 0.0
    %498 = vmatpush2.msra.mxu0 0.0
    %499 = vmatprep.subr.mxu0 0.0
    %500 = vmatpush2.msra.mxu0 0.0
    %501 = vmatprep.subr.mxu0 0.0
    %502 = vmatpush2.msra.mxu0 0.0
    %503 = vmatprep.subr.mxu0 0.0
    %504 = vmatpush2.msra.mxu0 0.0
    %505 = vmatprep.subr.mxu0 0.0
    %506 = vmatpush2.msra.mxu0 0.0
    %507 = vmatprep.subr.mxu0 0.0
    %508 = vmatpush2.msra.mxu0 0.0
    %509 = vmatprep.subr.mxu0 0.0
    %510 = vmatpush2.msra.mxu0 0.0
    %511 = vmatprep.subr.mxu0 0.0
    %512 = vmatpush2.msra.mxu0 0.0
    %513 = vmatprep.subr.mxu0 0.0
    %514 = vmatpush2.msra.mxu0 0.0
    %515 = vmatprep.mubr.f32.mxu0 0.0
    %516 = vmatmul.mubr.f32.gmra.mxu0 %v446
    %v517 = vpop.f32.mrf.mxu0
    %v518 = vadd.f32 0.0, %v517
    %v519 = vpop.f32.mrf.mxu0
    %520 = vmatprep.mubr.f32.mxu0 0.0
    %521 = vmatmul.mubr.f32.gmra.mxu0 %v449
    %v522 = vpop.f32.mrf.mxu0
    %v523 = vadd.f32 0.0, %v522
    %v524 = vpop.f32.mrf.mxu0
    %525 = vdwg.mxu0
    %v527 = vsel %vm132, %v518, 0
    %v530 = vsel %vm132, %v523, 0
    %532 = vmatprep.subr.mxu0 0.0
    %533 = vmatpush1.msra.mxu0 0.0
    %534 = vmatprep.subr.mxu0 0.0
    %535 = vmatpush1.msra.mxu0 0.0
    %536 = vmatprep.subr.mxu0 0.0
    %537 = vmatpush1.msra.mxu0 0.0
    %538 = vmatprep.subr.mxu0 0.0
    %539 = vmatpush1.msra.mxu0 0.0
    %540 = vmatprep.subr.mxu0 0.0
    %541 = vmatpush1.msra.mxu0 0.0
    %542 = vmatprep.subr.mxu0 0.0
    %543 = vmatpush1.msra.mxu0 0.0
    %544 = vmatprep.subr.mxu0 0.0
    %545 = vmatpush1.msra.mxu0 0.0
    %546 = vmatprep.subr.mxu0 0.0
    %547 = vmatpush1.msra.mxu0 0.0
    %548 = vmatprep.subr.mxu0 0.0
    %549 = vmatpush1.msra.mxu0 0.0
    %550 = vmatprep.subr.mxu0 0.0
    %551 = vmatpush1.msra.mxu0 0.0
    %552 = vmatprep.subr.mxu0 0.0
    %553 = vmatpush1.msra.mxu0 0.0
    %554 = vmatprep.subr.mxu0 0.0
    %555 = vmatpush1.msra.mxu0 0.0
    %556 = vmatprep.subr.mxu0 0.0
    %557 = vmatpush1.msra.mxu0 0.0
    %558 = vmatprep.subr.mxu0 0.0
    %559 = vmatpush1.msra.mxu0 0.0
    %560 = vmatprep.subr.mxu0 0.0
    %561 = vmatpush1.msra.mxu0 0.0
    %562 = vmatprep.subr.mxu0 0.0
    %563 = vmatpush1.msra.mxu0 %v123
    %564 = vmatprep.subr.mxu0 0.0
    %565 = vmatpush2.msra.mxu0 0.0
    %566 = vmatprep.subr.mxu0 0.0
    %567 = vmatpush2.msra.mxu0 0.0
    %568 = vmatprep.subr.mxu0 0.0
    %569 = vmatpush2.msra.mxu0 0.0
    %570 = vmatprep.subr.mxu0 0.0
    %571 = vmatpush2.msra.mxu0 0.0
    %572 = vmatprep.subr.mxu0 0.0
    %573 = vmatpush2.msra.mxu0 0.0
    %574 = vmatprep.subr.mxu0 0.0
    %575 = vmatpush2.msra.mxu0 0.0
    %576 = vmatprep.subr.mxu0 0.0
    %577 = vmatpush2.msra.mxu0 0.0
    %578 = vmatprep.subr.mxu0 0.0
    %579 = vmatpush2.msra.mxu0 0.0
    %580 = vmatprep.subr.mxu0 0.0
    %581 = vmatpush2.msra.mxu0 0.0
    %582 = vmatprep.subr.mxu0 0.0
    %583 = vmatpush2.msra.mxu0 0.0
    %584 = vmatprep.subr.mxu0 0.0
    %585 = vmatpush2.msra.mxu0 0.0
    %586 = vmatprep.subr.mxu0 0.0
    %587 = vmatpush2.msra.mxu0 0.0
    %588 = vmatprep.subr.mxu0 0.0
    %589 = vmatpush2.msra.mxu0 0.0
    %590 = vmatprep.subr.mxu0 0.0
    %591 = vmatpush2.msra.mxu0 0.0
    %592 = vmatprep.subr.mxu0 0.0
    %593 = vmatpush2.msra.mxu0 0.0
    %594 = vmatprep.subr.mxu0 0.0
    %595 = vmatpush2.msra.mxu0 0.0
    %596 = vmatprep.mubr.f32.mxu0 0.0
    %597 = vmatmul.mubr.f32.gmra.mxu0 %v527
    %v598 = vpop.f32.mrf.mxu0
    %v599 = vadd.f32 0.0, %v598
    %v600 = vpop.f32.mrf.mxu0
    %601 = vmatprep.mubr.f32.mxu0 0.0
    %602 = vmatmul.mubr.f32.gmra.mxu0 %v530
    %v603 = vpop.f32.mrf.mxu0
    %v604 = vadd.f32 0.0, %v603
    %v605 = vpop.f32.mrf.mxu0
    %606 = vdwg.mxu0
    %v608 = vsel %vm132, %v318, 0
    %v611 = vsel %vm132, %v323, 0
    %613 = vmatprep.subr.mxu0 0.0
    %614 = vmatpush1.msra.mxu0 0.0
    %615 = vmatprep.subr.mxu0 0.0
    %616 = vmatpush1.msra.mxu0 0.0
    %617 = vmatprep.subr.mxu0 0.0
    %618 = vmatpush1.msra.mxu0 0.0
    %619 = vmatprep.subr.mxu0 0.0
    %620 = vmatpush1.msra.mxu0 0.0
    %621 = vmatprep.subr.mxu0 0.0
    %622 = vmatpush1.msra.mxu0 0.0
    %623 = vmatprep.subr.mxu0 0.0
    %624 = vmatpush1.msra.mxu0 0.0
    %625 = vmatprep.subr.mxu0 0.0
    %626 = vmatpush1.msra.mxu0 0.0
    %627 = vmatprep.subr.mxu0 0.0
    %628 = vmatpush1.msra.mxu0 0.0
    %629 = vmatprep.subr.mxu0 0.0
    %630 = vmatpush1.msra.mxu0 0.0
    %631 = vmatprep.subr.mxu0 0.0
    %632 = vmatpush1.msra.mxu0 0.0
    %633 = vmatprep.subr.mxu0 0.0
    %634 = vmatpush1.msra.mxu0 0.0
    %635 = vmatprep.subr.mxu0 0.0
    %636 = vmatpush1.msra.mxu0 0.0
    %637 = vmatprep.subr.mxu0 0.0
    %638 = vmatpush1.msra.mxu0 0.0
    %639 = vmatprep.subr.mxu0 0.0
    %640 = vmatpush1.msra.mxu0 0.0
    %641 = vmatprep.subr.mxu0 0.0
    %642 = vmatpush1.msra.mxu0 0.0
    %643 = vmatprep.subr.mxu0 0.0
    %644 = vmatpush1.msra.mxu0 %v122
    %645 = vmatprep.subr.mxu0 0.0
    %646 = vmatpush2.msra.mxu0 0.0
    %647 = vmatprep.subr.mxu0 0.0
    %648 = vmatpush2.msra.mxu0 0.0
    %649 = vmatprep.subr.mxu0 0.0
    %650 = vmatpush2.msra.mxu0 0.0
    %651 = vmatprep.subr.mxu0 0.0
    %652 = vmatpush2.msra.mxu0 0.0
    %653 = vmatprep.subr.mxu0 0.0
    %654 = vmatpush2.msra.mxu0 0.0
    %655 = vmatprep.subr.mxu0 0.0
    %656 = vmatpush2.msra.mxu0 0.0
    %657 = vmatprep.subr.mxu0 0.0
    %658 = vmatpush2.msra.mxu0 0.0
    %659 = vmatprep.subr.mxu0 0.0
    %660 = vmatpush2.msra.mxu0 0.0
    %661 = vmatprep.subr.mxu0 0.0
    %662 = vmatpush2.msra.mxu0 0.0
    %663 = vmatprep.subr.mxu0 0.0
    %664 = vmatpush2.msra.mxu0 0.0
    %665 = vmatprep.subr.mxu0 0.0
    %666 = vmatpush2.msra.mxu0 0.0
    %667 = vmatprep.subr.mxu0 0.0
    %668 = vmatpush2.msra.mxu0 0.0
    %669 = vmatprep.subr.mxu0 0.0
    %670 = vmatpush2.msra.mxu0 0.0
    %671 = vmatprep.subr.mxu0 0.0
    %672 = vmatpush2.msra.mxu0 0.0
    %673 = vmatprep.subr.mxu0 0.0
    %674 = vmatpush2.msra.mxu0 0.0
    %675 = vmatprep.subr.mxu0 0.0
    %676 = vmatpush2.msra.mxu0 0.0
    %677 = vmatprep.mubr.f32.mxu0 0.0
    %678 = vmatmul.mubr.f32.gmra.mxu0 %v608
    %v679 = vpop.f32.mrf.mxu0
    %v680 = vadd.f32 %v599, %v679
    %v681 = vpop.f32.mrf.mxu0
    %682 = vmatprep.mubr.f32.mxu0 0.0
    %683 = vmatmul.mubr.f32.gmra.mxu0 %v611
    %v684 = vpop.f32.mrf.mxu0
    %v685 = vadd.f32 %v604, %v684
    %v686 = vpop.f32.mrf.mxu0
    %687 = vdwg.mxu0
    %688 = vrot.lane.b32.xlu0 %v114, 112
    %v689 = vpop.permute.xlu0 %688
    %690 = vrot.lane.b32.xlu0 %v119, 112
    %v691 = vpop.permute.xlu0 %690
    %692 = vrot.lane.b32.xlu0 %v114, 80
    %v693 = vpop.permute.xlu0 %692
    %694 = vrot.lane.b32.xlu0 %v119, 80
    %v695 = vpop.permute.xlu0 %694
    %v696 = vsel %vm132, %v689, 0
    %v698 = vsel %vm132, %v691, 0
    %v700 = vsel %vm132, %v693, 0
    %v702 = vsel %vm132, %v695, 0
    %704 = vmatprep.subr.mxu0 0.0
    %705 = vmatpush1.xpose.msra.mxu0 0.0
    %706 = vmatprep.subr.mxu0 0.0
    %707 = vmatpush1.xpose.msra.mxu0 0.0
    %708 = vmatprep.subr.mxu0 0.0
    %709 = vmatpush1.xpose.msra.mxu0 0.0
    %710 = vmatprep.subr.mxu0 0.0
    %711 = vmatpush1.xpose.msra.mxu0 0.0
    %712 = vmatprep.subr.mxu0 0.0
    %713 = vmatpush1.xpose.msra.mxu0 0.0
    %714 = vmatprep.subr.mxu0 0.0
    %715 = vmatpush1.xpose.msra.mxu0 0.0
    %716 = vmatprep.subr.mxu0 0.0
    %717 = vmatpush1.xpose.msra.mxu0 0.0
    %718 = vmatprep.subr.mxu0 0.0
    %719 = vmatpush1.xpose.msra.mxu0 0.0
    %720 = vmatprep.subr.mxu0 0.0
    %721 = vmatpush1.xpose.msra.mxu0 0.0
    %722 = vmatprep.subr.mxu0 0.0
    %723 = vmatpush1.xpose.msra.mxu0 0.0
    %724 = vmatprep.subr.mxu0 0.0
    %725 = vmatpush1.xpose.msra.mxu0 0.0
    %726 = vmatprep.subr.mxu0 0.0
    %727 = vmatpush1.xpose.msra.mxu0 0.0
    %728 = vmatprep.subr.mxu0 0.0
    %729 = vmatpush1.xpose.msra.mxu0 0.0
    %730 = vmatprep.subr.mxu0 0.0
    %731 = vmatpush1.xpose.msra.mxu0 0.0
    %732 = vmatprep.subr.mxu0 0.0
    %733 = vmatpush1.xpose.msra.mxu0 %v702
    %734 = vmatprep.subr.mxu0 0.0
    %735 = vmatpush1.xpose.msra.mxu0 %v700
    %736 = vmatprep.subr.mxu0 0.0
    %737 = vmatpush2.xpose.msra.mxu0 0.0
    %738 = vmatprep.subr.mxu0 0.0
    %739 = vmatpush2.xpose.msra.mxu0 0.0
    %740 = vmatprep.subr.mxu0 0.0
    %741 = vmatpush2.xpose.msra.mxu0 0.0
    %742 = vmatprep.subr.mxu0 0.0
    %743 = vmatpush2.xpose.msra.mxu0 0.0
    %744 = vmatprep.subr.mxu0 0.0
    %745 = vmatpush2.xpose.msra.mxu0 0.0
    %746 = vmatprep.subr.mxu0 0.0
    %747 = vmatpush2.xpose.msra.mxu0 0.0
    %748 = vmatprep.subr.mxu0 0.0
    %749 = vmatpush2.xpose.msra.mxu0 0.0
    %750 = vmatprep.subr.mxu0 0.0
    %751 = vmatpush2.xpose.msra.mxu0 0.0
    %752 = vmatprep.subr.mxu0 0.0
    %753 = vmatpush2.xpose.msra.mxu0 0.0
    %754 = vmatprep.subr.mxu0 0.0
    %755 = vmatpush2.xpose.msra.mxu0 0.0
    %756 = vmatprep.subr.mxu0 0.0
    %757 = vmatpush2.xpose.msra.mxu0 0.0
    %758 = vmatprep.subr.mxu0 0.0
    %759 = vmatpush2.xpose.msra.mxu0 0.0
    %760 = vmatprep.subr.mxu0 0.0
    %761 = vmatpush2.xpose.msra.mxu0 0.0
    %762 = vmatprep.subr.mxu0 0.0
    %763 = vmatpush2.xpose.msra.mxu0 0.0
    %764 = vmatprep.subr.mxu0 0.0
    %765 = vmatpush2.xpose.msra.mxu0 0.0
    %766 = vmatprep.subr.mxu0 0.0
    %767 = vmatpush2.xpose.msra.mxu0 0.0
    %768 = vmatprep.mubr.f32.mxu0 0.0
    %769 = vmatmul.mubr.f32.gmra.mxu0 %v696
    %v770 = vpop.f32.mrf.mxu0
    %v771 = vadd.f32 %v29, %v770
    %v772 = vpop.f32.mrf.mxu0
    %773 = vmatprep.mubr.f32.mxu0 0.0
    %774 = vmatmul.mubr.f32.gmra.mxu0 %v698
    %v775 = vpop.f32.mrf.mxu0
    %v776 = vadd.f32 %v30, %v775
    %v777 = vpop.f32.mrf.mxu0
    %778 = vdwg.mxu0
    %v779 = vsel %vm216, %v771, -inf
    %780 = vmax.xlane.f32.xlu0 %v779
    %v781 = vpop.xlane.xlu0 %780
    %v782 = vsel %vm216, %v776, -inf
    %783 = vmax.xlane.f32.xlu0 %v782
    %v784 = vpop.xlane.xlu0 %783
    %v785 = vsub.f32 %v771, %v781
    %v786 = vsub.f32 %v776, %v784
    %v787 = vmul.f32 %v785, 1.442695
    %v788 = vpow.pop %v787
    %v789 = vmul.f32 %v786, 1.442695
    %v790 = vpow.pop %v789
    %v791 = vsel %vm216, %v788, 0.0
    %792 = vadd.xlane.f32.xlu0 %v791
    %v793 = vpop.xlane.xlu0 %792
    %v794 = vsel %vm216, %v790, 0.0
    %795 = vadd.xlane.f32.xlu0 %v794
    %v796 = vpop.xlane.xlu0 %795
    %v797 = vrcp.pop %v793
    %v798 = vrcp.pop %v796
    %v799 = vmul.f32 %v788, %v797
    %v800 = vmul.f32 %v790, %v798
    %801 = vrot.lane.b32.xlu0 %v114, 48
    %v802 = vpop.permute.xlu0 %801
    %803 = vrot.lane.b32.xlu0 %v119, 48
    %v804 = vpop.permute.xlu0 %803
    %v808 = vsel %vm216, %v799, 0
    %v811 = vsel %vm216, %v800, 0
    %813 = vmatprep.subr.mxu0 0.0
    %814 = vmatpush1.msra.mxu0 0.0
    %815 = vmatprep.subr.mxu0 0.0
    %816 = vmatpush1.msra.mxu0 0.0
    %817 = vmatprep.subr.mxu0 0.0
    %818 = vmatpush1.msra.mxu0 0.0
    %819 = vmatprep.subr.mxu0 0.0
    %820 = vmatpush1.msra.mxu0 0.0
    %821 = vmatprep.subr.mxu0 0.0
    %822 = vmatpush1.msra.mxu0 0.0
    %823 = vmatprep.subr.mxu0 0.0
    %824 = vmatpush1.msra.mxu0 0.0
    %825 = vmatprep.subr.mxu0 0.0
    %826 = vmatpush1.msra.mxu0 0.0
    %827 = vmatprep.subr.mxu0 0.0
    %828 = vmatpush1.msra.mxu0 0.0
    %829 = vmatprep.subr.mxu0 0.0
    %830 = vmatpush1.msra.mxu0 0.0
    %831 = vmatprep.subr.mxu0 0.0
    %832 = vmatpush1.msra.mxu0 0.0
    %833 = vmatprep.subr.mxu0 0.0
    %834 = vmatpush1.msra.mxu0 0.0
    %835 = vmatprep.subr.mxu0 0.0
    %836 = vmatpush1.msra.mxu0 0.0
    %837 = vmatprep.subr.mxu0 0.0
    %838 = vmatpush1.msra.mxu0 0.0
    %839 = vmatprep.subr.mxu0 0.0
    %840 = vmatpush1.msra.mxu0 0.0
    %841 = vmatprep.subr.mxu0 0.0
    %842 = vmatpush1.msra.mxu0 %v804
    %843 = vmatprep.subr.mxu0 0.0
    %844 = vmatpush1.msra.mxu0 %v802
    %845 = vmatprep.subr.mxu0 0.0
    %846 = vmatpush2.msra.mxu0 0.0
    %847 = vmatprep.subr.mxu0 0.0
    %848 = vmatpush2.msra.mxu0 0.0
    %849 = vmatprep.subr.mxu0 0.0
    %850 = vmatpush2.msra.mxu0 0.0
    %851 = vmatprep.subr.mxu0 0.0
    %852 = vmatpush2.msra.mxu0 0.0
    %853 = vmatprep.subr.mxu0 0.0
    %854 = vmatpush2.msra.mxu0 0.0
    %855 = vmatprep.subr.mxu0 0.0
    %856 = vmatpush2.msra.mxu0 0.0
    %857 = vmatprep.subr.mxu0 0.0
    %858 = vmatpush2.msra.mxu0 0.0
    %859 = vmatprep.subr.mxu0 0.0
    %860 = vmatpush2.msra.mxu0 0.0
    %861 = vmatprep.subr.mxu0 0.0
    %862 = vmatpush2.msra.mxu0 0.0
    %863 = vmatprep.subr.mxu0 0.0
    %864 = vmatpush2.msra.mxu0 0.0
    %865 = vmatprep.subr.mxu0 0.0
    %866 = vmatpush2.msra.mxu0 0.0
    %867 = vmatprep.subr.mxu0 0.0
    %868 = vmatpush2.msra.mxu0 0.0
    %869 = vmatprep.subr.mxu0 0.0
    %870 = vmatpush2.msra.mxu0 0.0
    %871 = vmatprep.subr.mxu0 0.0
    %872 = vmatpush2.msra.mxu0 0.0
    %873 = vmatprep.subr.mxu0 0.0
    %874 = vmatpush2.msra.mxu0 0.0
    %875 = vmatprep.subr.mxu0 0.0
    %876 = vmatpush2.msra.mxu0 0.0
    %877 = vmatprep.mubr.f32.mxu0 0.0
    %878 = vmatmul.mubr.f32.gmra.mxu0 %v808
    %v879 = vpop.f32.mrf.mxu0
    %v880 = vadd.f32 0.0, %v879
    %v881 = vpop.f32.mrf.mxu0
    %882 = vmatprep.mubr.f32.mxu0 0.0
    %883 = vmatmul.mubr.f32.gmra.mxu0 %v811
    %v884 = vpop.f32.mrf.mxu0
    %v885 = vadd.f32 0.0, %v884
    %v886 = vpop.f32.mrf.mxu0
    %887 = vdwg.mxu0
    %v889 = vsel %vm132, %v880, 0
    %v892 = vsel %vm132, %v885, 0
    %894 = vmatprep.subr.mxu0 0.0
    %895 = vmatpush1.msra.mxu0 0.0
    %896 = vmatprep.subr.mxu0 0.0
    %897 = vmatpush1.msra.mxu0 0.0
    %898 = vmatprep.subr.mxu0 0.0
    %899 = vmatpush1.msra.mxu0 0.0
    %900 = vmatprep.subr.mxu0 0.0
    %901 = vmatpush1.msra.mxu0 0.0
    %902 = vmatprep.subr.mxu0 0.0
    %903 = vmatpush1.msra.mxu0 0.0
    %904 = vmatprep.subr.mxu0 0.0
    %905 = vmatpush1.msra.mxu0 0.0
    %906 = vmatprep.subr.mxu0 0.0
    %907 = vmatpush1.msra.mxu0 0.0
    %908 = vmatprep.subr.mxu0 0.0
    %909 = vmatpush1.msra.mxu0 0.0
    %910 = vmatprep.subr.mxu0 0.0
    %911 = vmatpush1.msra.mxu0 0.0
    %912 = vmatprep.subr.mxu0 0.0
    %913 = vmatpush1.msra.mxu0 0.0
    %914 = vmatprep.subr.mxu0 0.0
    %915 = vmatpush1.msra.mxu0 0.0
    %916 = vmatprep.subr.mxu0 0.0
    %917 = vmatpush1.msra.mxu0 0.0
    %918 = vmatprep.subr.mxu0 0.0
    %919 = vmatpush1.msra.mxu0 0.0
    %920 = vmatprep.subr.mxu0 0.0
    %921 = vmatpush1.msra.mxu0 0.0
    %922 = vmatprep.subr.mxu0 0.0
    %923 = vmatpush1.msra.mxu0 0.0
    %924 = vmatprep.subr.mxu0 0.0
    %925 = vmatpush1.msra.mxu0 %v124
    %926 = vmatprep.subr.mxu0 0.0
    %927 = vmatpush2.msra.mxu0 0.0
    %928 = vmatprep.subr.mxu0 0.0
    %929 = vmatpush2.msra.mxu0 0.0
    %930 = vmatprep.subr.mxu0 0.0
    %931 = vmatpush2.msra.mxu0 0.0
    %932 = vmatprep.subr.mxu0 0.0
    %933 = vmatpush2.msra.mxu0 0.0
    %934 = vmatprep.subr.mxu0 0.0
    %935 = vmatpush2.msra.mxu0 0.0
    %936 = vmatprep.subr.mxu0 0.0
    %937 = vmatpush2.msra.mxu0 0.0
    %938 = vmatprep.subr.mxu0 0.0
    %939 = vmatpush2.msra.mxu0 0.0
    %940 = vmatprep.subr.mxu0 0.0
    %941 = vmatpush2.msra.mxu0 0.0
    %942 = vmatprep.subr.mxu0 0.0
    %943 = vmatpush2.msra.mxu0 0.0
    %944 = vmatprep.subr.mxu0 0.0
    %945 = vmatpush2.msra.mxu0 0.0
    %946 = vmatprep.subr.mxu0 0.0
    %947 = vmatpush2.msra.mxu0 0.0
    %948 = vmatprep.subr.mxu0 0.0
    %949 = vmatpush2.msra.mxu0 0.0
    %950 = vmatprep.subr.mxu0 0.0
    %951 = vmatpush2.msra.mxu0 0.0
    %952 = vmatprep.subr.mxu0 0.0
    %953 = vmatpush2.msra.mxu0 0.0
    %954 = vmatprep.subr.mxu0 0.0
    %955 = vmatpush2.msra.mxu0 0.0
    %956 = vmatprep.subr.mxu0 0.0
    %957 = vmatpush2.msra.mxu0 0.0
    %958 = vmatprep.mubr.f32.mxu0 0.0
    %959 = vmatmul.mubr.f32.gmra.mxu0 %v889
    %v960 = vpop.f32.mrf.mxu0
    %v961 = vadd.f32 0.0, %v960
    %v962 = vpop.f32.mrf.mxu0
    %963 = vmatprep.mubr.f32.mxu0 0.0
    %964 = vmatmul.mubr.f32.gmra.mxu0 %v892
    %v965 = vpop.f32.mrf.mxu0
    %v966 = vadd.f32 0.0, %v965
    %v967 = vpop.f32.mrf.mxu0
    %968 = vdwg.mxu0
    %v969 = vadd.f32 %v680, %v961
    %v970 = vadd.f32 %v685, %v966
    %971 = vrot.lane.b32.xlu0 %v114, 104
    %v972 = vpop.permute.xlu0 %971
    %973 = vrot.lane.b32.xlu0 %v119, 104
    %v974 = vpop.permute.xlu0 %973
    %975 = vrot.lane.b32.xlu0 %v114, 72
    %v976 = vpop.permute.xlu0 %975
    %977 = vrot.lane.b32.xlu0 %v119, 72
    %v978 = vpop.permute.xlu0 %977
    %v979 = vsel %vm132, %v972, 0
    %v981 = vsel %vm132, %v974, 0
    %v983 = vsel %vm132, %v976, 0
    %v985 = vsel %vm132, %v978, 0
    %987 = vmatprep.subr.mxu0 0.0
    %988 = vmatpush1.xpose.msra.mxu0 0.0
    %989 = vmatprep.subr.mxu0 0.0
    %990 = vmatpush1.xpose.msra.mxu0 0.0
    %991 = vmatprep.subr.mxu0 0.0
    %992 = vmatpush1.xpose.msra.mxu0 0.0
    %993 = vmatprep.subr.mxu0 0.0
    %994 = vmatpush1.xpose.msra.mxu0 0.0
    %995 = vmatprep.subr.mxu0 0.0
    %996 = vmatpush1.xpose.msra.mxu0 0.0
    %997 = vmatprep.subr.mxu0 0.0
    %998 = vmatpush1.xpose.msra.mxu0 0.0
    %999 = vmatprep.subr.mxu0 0.0
    %1000 = vmatpush1.xpose.msra.mxu0 0.0
    %1001 = vmatprep.subr.mxu0 0.0
    %1002 = vmatpush1.xpose.msra.mxu0 0.0
    %1003 = vmatprep.subr.mxu0 0.0
    %1004 = vmatpush1.xpose.msra.mxu0 0.0
    %1005 = vmatprep.subr.mxu0 0.0
    %1006 = vmatpush1.xpose.msra.mxu0 0.0
    %1007 = vmatprep.subr.mxu0 0.0
    %1008 = vmatpush1.xpose.msra.mxu0 0.0
    %1009 = vmatprep.subr.mxu0 0.0
    %1010 = vmatpush1.xpose.msra.mxu0 0.0
    %1011 = vmatprep.subr.mxu0 0.0
    %1012 = vmatpush1.xpose.msra.mxu0 0.0
    %1013 = vmatprep.subr.mxu0 0.0
    %1014 = vmatpush1.xpose.msra.mxu0 0.0
    %1015 = vmatprep.subr.mxu0 0.0
    %1016 = vmatpush1.xpose.msra.mxu0 %v985
    %1017 = vmatprep.subr.mxu0 0.0
    %1018 = vmatpush1.xpose.msra.mxu0 %v983
    %1019 = vmatprep.subr.mxu0 0.0
    %1020 = vmatpush2.xpose.msra.mxu0 0.0
    %1021 = vmatprep.subr.mxu0 0.0
    %1022 = vmatpush2.xpose.msra.mxu0 0.0
    %1023 = vmatprep.subr.mxu0 0.0
    %1024 = vmatpush2.xpose.msra.mxu0 0.0
    %1025 = vmatprep.subr.mxu0 0.0
    %1026 = vmatpush2.xpose.msra.mxu0 0.0
    %1027 = vmatprep.subr.mxu0 0.0
    %1028 = vmatpush2.xpose.msra.mxu0 0.0
    %1029 = vmatprep.subr.mxu0 0.0
    %1030 = vmatpush2.xpose.msra.mxu0 0.0
    %1031 = vmatprep.subr.mxu0 0.0
    %1032 = vmatpush2.xpose.msra.mxu0 0.0
    %1033 = vmatprep.subr.mxu0 0.0
    %1034 = vmatpush2.xpose.msra.mxu0 0.0
    %1035 = vmatprep.subr.mxu0 0.0
    %1036 = vmatpush2.xpose.msra.mxu0 0.0
    %1037 = vmatprep.subr.mxu0 0.0
    %1038 = vmatpush2.xpose.msra.mxu0 0.0
    %1039 = vmatprep.subr.mxu0 0.0
    %1040 = vmatpush2.xpose.msra.mxu0 0.0
    %1041 = vmatprep.subr.mxu0 0.0
    %1042 = vmatpush2.xpose.msra.mxu0 0.0
    %1043 = vmatprep.subr.mxu0 0.0
    %1044 = vmatpush2.xpose.msra.mxu0 0.0
    %1045 = vmatprep.subr.mxu0 0.0
    %1046 = vmatpush2.xpose.msra.mxu0 0.0
    %1047 = vmatprep.subr.mxu0 0.0
    %1048 = vmatpush2.xpose.msra.mxu0 0.0
    %1049 = vmatprep.subr.mxu0 0.0
    %1050 = vmatpush2.xpose.msra.mxu0 0.0
    %1051 = vmatprep.mubr.f32.mxu0 0.0
    %1052 = vmatmul.mubr.f32.gmra.mxu0 %v979
    %v1053 = vpop.f32.mrf.mxu0
    %v1054 = vadd.f32 %v29, %v1053
    %v1055 = vpop.f32.mrf.mxu0
    %1056 = vmatprep.mubr.f32.mxu0 0.0
    %1057 = vmatmul.mubr.f32.gmra.mxu0 %v981
    %v1058 = vpop.f32.mrf.mxu0
    %v1059 = vadd.f32 %v30, %v1058
    %v1060 = vpop.f32.mrf.mxu0
    %1061 = vdwg.mxu0
    %v1062 = vsel %vm216, %v1054, -inf
    %1063 = vmax.xlane.f32.xlu0 %v1062
    %v1064 = vpop.xlane.xlu0 %1063
    %v1065 = vsel %vm216, %v1059, -inf
    %1066 = vmax.xlane.f32.xlu0 %v1065
    %v1067 = vpop.xlane.xlu0 %1066
    %v1068 = vsub.f32 %v1054, %v1064
    %v1069 = vsub.f32 %v1059, %v1067
    %v1070 = vmul.f32 %v1068, 1.442695
    %v1071 = vpow.pop %v1070
    %v1072 = vmul.f32 %v1069, 1.442695
    %v1073 = vpow.pop %v1072
    %v1074 = vsel %vm216, %v1071, 0.0
    %1075 = vadd.xlane.f32.xlu0 %v1074
    %v1076 = vpop.xlane.xlu0 %1075
    %v1077 = vsel %vm216, %v1073, 0.0
    %1078 = vadd.xlane.f32.xlu0 %v1077
    %v1079 = vpop.xlane.xlu0 %1078
    %v1080 = vrcp.pop %v1076
    %v1081 = vrcp.pop %v1079
    %v1082 = vmul.f32 %v1071, %v1080
    %v1083 = vmul.f32 %v1073, %v1081
    %1084 = vrot.lane.b32.xlu0 %v114, 40
    %v1085 = vpop.permute.xlu0 %1084
    %1086 = vrot.lane.b32.xlu0 %v119, 40
    %v1087 = vpop.permute.xlu0 %1086
    %v1091 = vsel %vm216, %v1082, 0
    %v1094 = vsel %vm216, %v1083, 0
    %1096 = vmatprep.subr.mxu0 0.0
    %1097 = vmatpush1.msra.mxu0 0.0
    %1098 = vmatprep.subr.mxu0 0.0
    %1099 = vmatpush1.msra.mxu0 0.0
    %1100 = vmatprep.subr.mxu0 0.0
    %1101 = vmatpush1.msra.mxu0 0.0
    %1102 = vmatprep.subr.mxu0 0.0
    %1103 = vmatpush1.msra.mxu0 0.0
    %1104 = vmatprep.subr.mxu0 0.0
    %1105 = vmatpush1.msra.mxu0 0.0
    %1106 = vmatprep.subr.mxu0 0.0
    %1107 = vmatpush1.msra.mxu0 0.0
    %1108 = vmatprep.subr.mxu0 0.0
    %1109 = vmatpush1.msra.mxu0 0.0
    %1110 = vmatprep.subr.mxu0 0.0
    %1111 = vmatpush1.msra.mxu0 0.0
    %1112 = vmatprep.subr.mxu0 0.0
    %1113 = vmatpush1.msra.mxu0 0.0
    %1114 = vmatprep.subr.mxu0 0.0
    %1115 = vmatpush1.msra.mxu0 0.0
    %1116 = vmatprep.subr.mxu0 0.0
    %1117 = vmatpush1.msra.mxu0 0.0
    %1118 = vmatprep.subr.mxu0 0.0
    %1119 = vmatpush1.msra.mxu0 0.0
    %1120 = vmatprep.subr.mxu0 0.0
    %1121 = vmatpush1.msra.mxu0 0.0
    %1122 = vmatprep.subr.mxu0 0.0
    %1123 = vmatpush1.msra.mxu0 0.0
    %1124 = vmatprep.subr.mxu0 0.0
    %1125 = vmatpush1.msra.mxu0 %v1087
    %1126 = vmatprep.subr.mxu0 0.0
    %1127 = vmatpush1.msra.mxu0 %v1085
    %1128 = vmatprep.subr.mxu0 0.0
    %1129 = vmatpush2.msra.mxu0 0.0
    %1130 = vmatprep.subr.mxu0 0.0
    %1131 = vmatpush2.msra.mxu0 0.0
    %1132 = vmatprep.subr.mxu0 0.0
    %1133 = vmatpush2.msra.mxu0 0.0
    %1134 = vmatprep.subr.mxu0 0.0
    %1135 = vmatpush2.msra.mxu0 0.0
    %1136 = vmatprep.subr.mxu0 0.0
    %1137 = vmatpush2.msra.mxu0 0.0
    %1138 = vmatprep.subr.mxu0 0.0
    %1139 = vmatpush2.msra.mxu0 0.0
    %1140 = vmatprep.subr.mxu0 0.0
    %1141 = vmatpush2.msra.mxu0 0.0
    %1142 = vmatprep.subr.mxu0 0.0
    %1143 = vmatpush2.msra.mxu0 0.0
    %1144 = vmatprep.subr.mxu0 0.0
    %1145 = vmatpush2.msra.mxu0 0.0
    %1146 = vmatprep.subr.mxu0 0.0
    %1147 = vmatpush2.msra.mxu0 0.0
    %1148 = vmatprep.subr.mxu0 0.0
    %1149 = vmatpush2.msra.mxu0 0.0
    %1150 = vmatprep.subr.mxu0 0.0
    %1151 = vmatpush2.msra.mxu0 0.0
    %1152 = vmatprep.subr.mxu0 0.0
    %1153 = vmatpush2.msra.mxu0 0.0
    %1154 = vmatprep.subr.mxu0 0.0
    %1155 = vmatpush2.msra.mxu0 0.0
    %1156 = vmatprep.subr.mxu0 0.0
    %1157 = vmatpush2.msra.mxu0 0.0
    %1158 = vmatprep.subr.mxu0 0.0
    %1159 = vmatpush2.msra.mxu0 0.0
    %1160 = vmatprep.mubr.f32.mxu0 0.0
    %1161 = vmatmul.mubr.f32.gmra.mxu0 %v1091
    %v1162 = vpop.f32.mrf.mxu0
    %v1163 = vadd.f32 0.0, %v1162
    %v1164 = vpop.f32.mrf.mxu0
    %1165 = vmatprep.mubr.f32.mxu0 0.0
    %1166 = vmatmul.mubr.f32.gmra.mxu0 %v1094
    %v1167 = vpop.f32.mrf.mxu0
    %v1168 = vadd.f32 0.0, %v1167
    %v1169 = vpop.f32.mrf.mxu0
    %1170 = vdwg.mxu0
    %v1172 = vsel %vm132, %v1163, 0
    %v1175 = vsel %vm132, %v1168, 0
    %1177 = vmatprep.subr.mxu0 0.0
    %1178 = vmatpush1.msra.mxu0 0.0
    %1179 = vmatprep.subr.mxu0 0.0
    %1180 = vmatpush1.msra.mxu0 0.0
    %1181 = vmatprep.subr.mxu0 0.0
    %1182 = vmatpush1.msra.mxu0 0.0
    %1183 = vmatprep.subr.mxu0 0.0
    %1184 = vmatpush1.msra.mxu0 0.0
    %1185 = vmatprep.subr.mxu0 0.0
    %1186 = vmatpush1.msra.mxu0 0.0
    %1187 = vmatprep.subr.mxu0 0.0
    %1188 = vmatpush1.msra.mxu0 0.0
    %1189 = vmatprep.subr.mxu0 0.0
    %1190 = vmatpush1.msra.mxu0 0.0
    %1191 = vmatprep.subr.mxu0 0.0
    %1192 = vmatpush1.msra.mxu0 0.0
    %1193 = vmatprep.subr.mxu0 0.0
    %1194 = vmatpush1.msra.mxu0 0.0
    %1195 = vmatprep.subr.mxu0 0.0
    %1196 = vmatpush1.msra.mxu0 0.0
    %1197 = vmatprep.subr.mxu0 0.0
    %1198 = vmatpush1.msra.mxu0 0.0
    %1199 = vmatprep.subr.mxu0 0.0
    %1200 = vmatpush1.msra.mxu0 0.0
    %1201 = vmatprep.subr.mxu0 0.0
    %1202 = vmatpush1.msra.mxu0 0.0
    %1203 = vmatprep.subr.mxu0 0.0
    %1204 = vmatpush1.msra.mxu0 0.0
    %1205 = vmatprep.subr.mxu0 0.0
    %1206 = vmatpush1.msra.mxu0 0.0
    %1207 = vmatprep.subr.mxu0 0.0
    %1208 = vmatpush1.msra.mxu0 %v125
    %1209 = vmatprep.subr.mxu0 0.0
    %1210 = vmatpush2.msra.mxu0 0.0
    %1211 = vmatprep.subr.mxu0 0.0
    %1212 = vmatpush2.msra.mxu0 0.0
    %1213 = vmatprep.subr.mxu0 0.0
    %1214 = vmatpush2.msra.mxu0 0.0
    %1215 = vmatprep.subr.mxu0 0.0
    %1216 = vmatpush2.msra.mxu0 0.0
    %1217 = vmatprep.subr.mxu0 0.0
    %1218 = vmatpush2.msra.mxu0 0.0
    %1219 = vmatprep.subr.mxu0 0.0
    %1220 = vmatpush2.msra.mxu0 0.0
    %1221 = vmatprep.subr.mxu0 0.0
    %1222 = vmatpush2.msra.mxu0 0.0
    %1223 = vmatprep.subr.mxu0 0.0
    %1224 = vmatpush2.msra.mxu0 0.0
    %1225 = vmatprep.subr.mxu0 0.0
    %1226 = vmatpush2.msra.mxu0 0.0
    %1227 = vmatprep.subr.mxu0 0.0
    %1228 = vmatpush2.msra.mxu0 0.0
    %1229 = vmatprep.subr.mxu0 0.0
    %1230 = vmatpush2.msra.mxu0 0.0
    %1231 = vmatprep.subr.mxu0 0.0
    %1232 = vmatpush2.msra.mxu0 0.0
    %1233 = vmatprep.subr.mxu0 0.0
    %1234 = vmatpush2.msra.mxu0 0.0
    %1235 = vmatprep.subr.mxu0 0.0
    %1236 = vmatpush2.msra.mxu0 0.0
    %1237 = vmatprep.subr.mxu0 0.0
    %1238 = vmatpush2.msra.mxu0 0.0
    %1239 = vmatprep.subr.mxu0 0.0
    %1240 = vmatpush2.msra.mxu0 0.0
    %1241 = vmatprep.mubr.f32.mxu0 0.0
    %1242 = vmatmul.mubr.f32.gmra.mxu0 %v1172
    %v1243 = vpop.f32.mrf.mxu0
    %v1244 = vadd.f32 0.0, %v1243
    %v1245 = vpop.f32.mrf.mxu0
    %1246 = vmatprep.mubr.f32.mxu0 0.0
    %1247 = vmatmul.mubr.f32.gmra.mxu0 %v1175
    %v1248 = vpop.f32.mrf.mxu0
    %v1249 = vadd.f32 0.0, %v1248
    %v1250 = vpop.f32.mrf.mxu0
    %1251 = vdwg.mxu0
    %v1252 = vadd.f32 %v969, %v1244
    %v1253 = vadd.f32 %v970, %v1249
    %v1254 = vlaneseq
    %v1255 = vshrl.u32 %v1254, 7
    %v1256 = vsub.s32 1, %v1255
    %v1257 = vrot.slane %v31, %v1256
    %v1258 = vadd.f32 %v1252, %v1257
    %v1259 = vadd.f32 %v1253, %v1257
    %v1260 = vadd.f32 %v27, %v1258
    %v1261 = vadd.f32 %v28, %v1259
    %v1262 = vsel %vm40, %v1260, 0.0
    %1263 = vadd.xlane.f32.xlu0 %v1262
    %v1264 = vpop.xlane.xlu0 %1263
    %v1265 = vsel %vm40, %v1261, 0.0
    %1266 = vadd.xlane.f32.xlu0 %v1265
    %v1267 = vpop.xlane.xlu0 %1266
    %v1268 = vrcp.pop 32.0
    %v1269 = vmul.f32 %v1264, %v1268
    %v1270 = vmul.f32 %v1267, %v1268
    %v1271 = vsub.f32 %v1260, %v1269
    %v1272 = vsub.f32 %v1261, %v1270
    %v1273 = vmul.f32 %v1271, %v1271
    %v1274 = vmul.f32 %v1272, %v1272
    %v1275 = vsel %vm40, %v1273, 0.0
    %1276 = vadd.xlane.f32.xlu0 %v1275
    %v1277 = vpop.xlane.xlu0 %1276
    %v1278 = vsel %vm40, %v1274, 0.0
    %1279 = vadd.xlane.f32.xlu0 %v1278
    %v1280 = vpop.xlane.xlu0 %1279
    %v1281 = vmul.f32 %v1277, %v1268
    %v1282 = vmul.f32 %v1280, %v1268
    %v1283 = vadd.f32 %v1281, 1e-05
    %v1284 = vadd.f32 %v1282, 1e-05
    %v1285 = vrsqrt.pop %v1283
    %v1286 = vrsqrt.pop %v1284
    %v1287 = vmul.f32 %v1271, %v1285
    %v1288 = vmul.f32 %v1272, %v1286
    %v1289 = vlaneseq
    %v1290 = vshrl.u32 %v1289, 7
    %v1291 = vsub.s32 2, %v1290
    %v1292 = vrot.slane %v31, %v1291
    %v1293 = vmul.f32 %v1287, %v1292
    %v1294 = vmul.f32 %v1288, %v1292
    %v1295 = vlaneseq
    %v1296 = vshrl.u32 %v1295, 7
    %v1297 = vsub.s32 3, %v1296
    %v1298 = vrot.slane %v31, %v1297
    %v1299 = vadd.f32 %v1293, %v1298
    %v1300 = vadd.f32 %v1294, %v1298
    %v1301 = vld [vmem:[%s4] sm:$0xff]
    %v1302 = vld [vmem:[%s4 + $0x8] sm:$0xff]
    %v1303 = vld [vmem:[%s4 + $0x10] sm:$0xff]
    %v1304 = vld [vmem:[%s4 + $0x18] sm:$0xff]
    %v1305 = vlaneseq
    %v1306 = vshrl.u32 %v1305, 7
    %v1307 = vsub.s32 4, %v1306
    %v1308 = vrot.slane %v31, %v1307
    %v1310 = vsel %vm40, %v1299, 0
    %v1313 = vsel %vm40, %v1300, 0
    %1315 = vmatprep.subr.mxu0 0.0
    %1316 = vmatpush1.msra.mxu0 0.0
    %1317 = vmatprep.subr.mxu0 0.0
    %1318 = vmatpush1.msra.mxu0 0.0
    %1319 = vmatprep.subr.mxu0 0.0
    %1320 = vmatpush1.msra.mxu0 0.0
    %1321 = vmatprep.subr.mxu0 0.0
    %1322 = vmatpush1.msra.mxu0 0.0
    %1323 = vmatprep.subr.mxu0 0.0
    %1324 = vmatpush1.msra.mxu0 0.0
    %1325 = vmatprep.subr.mxu0 0.0
    %1326 = vmatpush1.msra.mxu0 0.0
    %1327 = vmatprep.subr.mxu0 0.0
    %1328 = vmatpush1.msra.mxu0 0.0
    %1329 = vmatprep.subr.mxu0 0.0
    %1330 = vmatpush1.msra.mxu0 0.0
    %1331 = vmatprep.subr.mxu0 0.0
    %1332 = vmatpush1.msra.mxu0 0.0
    %1333 = vmatprep.subr.mxu0 0.0
    %1334 = vmatpush1.msra.mxu0 0.0
    %1335 = vmatprep.subr.mxu0 0.0
    %1336 = vmatpush1.msra.mxu0 0.0
    %1337 = vmatprep.subr.mxu0 0.0
    %1338 = vmatpush1.msra.mxu0 0.0
    %1339 = vmatprep.subr.mxu0 0.0
    %1340 = vmatpush1.msra.mxu0 %v1304
    %1341 = vmatprep.subr.mxu0 0.0
    %1342 = vmatpush1.msra.mxu0 %v1303
    %1343 = vmatprep.subr.mxu0 0.0
    %1344 = vmatpush1.msra.mxu0 %v1302
    %1345 = vmatprep.subr.mxu0 0.0
    %1346 = vmatpush1.msra.mxu0 %v1301
    %1347 = vmatprep.subr.mxu0 0.0
    %1348 = vmatpush2.msra.mxu0 0.0
    %1349 = vmatprep.subr.mxu0 0.0
    %1350 = vmatpush2.msra.mxu0 0.0
    %1351 = vmatprep.subr.mxu0 0.0
    %1352 = vmatpush2.msra.mxu0 0.0
    %1353 = vmatprep.subr.mxu0 0.0
    %1354 = vmatpush2.msra.mxu0 0.0
    %1355 = vmatprep.subr.mxu0 0.0
    %1356 = vmatpush2.msra.mxu0 0.0
    %1357 = vmatprep.subr.mxu0 0.0
    %1358 = vmatpush2.msra.mxu0 0.0
    %1359 = vmatprep.subr.mxu0 0.0
    %1360 = vmatpush2.msra.mxu0 0.0
    %1361 = vmatprep.subr.mxu0 0.0
    %1362 = vmatpush2.msra.mxu0 0.0
    %1363 = vmatprep.subr.mxu0 0.0
    %1364 = vmatpush2.msra.mxu0 0.0
    %1365 = vmatprep.subr.mxu0 0.0
    %1366 = vmatpush2.msra.mxu0 0.0
    %1367 = vmatprep.subr.mxu0 0.0
    %1368 = vmatpush2.msra.mxu0 0.0
    %1369 = vmatprep.subr.mxu0 0.0
    %1370 = vmatpush2.msra.mxu0 0.0
    %1371 = vmatprep.subr.mxu0 0.0
    %1372 = vmatpush2.msra.mxu0 0.0
    %1373 = vmatprep.subr.mxu0 0.0
    %1374 = vmatpush2.msra.mxu0 0.0
    %1375 = vmatprep.subr.mxu0 0.0
    %1376 = vmatpush2.msra.mxu0 0.0
    %1377 = vmatprep.subr.mxu0 0.0
    %1378 = vmatpush2.msra.mxu0 0.0
    %1379 = vmatprep.mubr.f32.mxu0 0.0
    %1380 = vmatmul.mubr.f32.gmra.mxu0 %v1310
    %v1381 = vpop.f32.mrf.mxu0
    %v1382 = vadd.f32 %v1308, %v1381
    %v1383 = vpop.f32.mrf.mxu0
    %1384 = vmatprep.mubr.f32.mxu0 0.0
    %1385 = vmatmul.mubr.f32.gmra.mxu0 %v1313
    %v1386 = vpop.f32.mrf.mxu0
    %v1387 = vadd.f32 %v1308, %v1386
    %v1388 = vpop.f32.mrf.mxu0
    %1389 = vdwg.mxu0
    %v1390 = vmax.f32 %v1382, 0.0
    %v1391 = vmax.f32 %v1387, 0.0
    %v1392 = vld [vmem:[%s5] sm:$0xff]
    %v1393 = vld [vmem:[%s5 + $0x8] sm:$0xff]
    %v1394 = vld [vmem:[%s5 + $0x10] sm:$0xff]
    %v1395 = vld [vmem:[%s5 + $0x18] sm:$0xff]
    %v1396 = vld [vmem:[%s5 + $0x20] sm:$0xff]
    %v1397 = vld [vmem:[%s5 + $0x28] sm:$0xff]
    %v1398 = vld [vmem:[%s5 + $0x30] sm:$0xff]
    %v1399 = vld [vmem:[%s5 + $0x38] sm:$0xff]
    %v1400 = vld [vmem:[%s5 + $0x40] sm:$0xff]
    %v1401 = vld [vmem:[%s5 + $0x48] sm:$0xff]
    %v1402 = vld [vmem:[%s5 + $0x50] sm:$0xff]
    %v1403 = vld [vmem:[%s5 + $0x58] sm:$0xff]
    %v1404 = vld [vmem:[%s5 + $0x60] sm:$0xff]
    %v1405 = vld [vmem:[%s5 + $0x68] sm:$0xff]
    %v1406 = vld [vmem:[%s5 + $0x70] sm:$0xff]
    %v1407 = vld [vmem:[%s5 + $0x78] sm:$0xff]
    %v1408 = vlaneseq
    %v1409 = vshrl.u32 %v1408, 7
    %v1410 = vsub.s32 5, %v1409
    %v1411 = vrot.slane %v31, %v1410
    %1412 = vmatprep.subr.mxu0 0.0
    %1413 = vmatpush1.msra.mxu0 %v1407
    %1414 = vmatprep.subr.mxu0 0.0
    %1415 = vmatpush1.msra.mxu0 %v1406
    %1416 = vmatprep.subr.mxu0 0.0
    %1417 = vmatpush1.msra.mxu0 %v1405
    %1418 = vmatprep.subr.mxu0 0.0
    %1419 = vmatpush1.msra.mxu0 %v1404
    %1420 = vmatprep.subr.mxu0 0.0
    %1421 = vmatpush1.msra.mxu0 %v1403
    %1422 = vmatprep.subr.mxu0 0.0
    %1423 = vmatpush1.msra.mxu0 %v1402
    %1424 = vmatprep.subr.mxu0 0.0
    %1425 = vmatpush1.msra.mxu0 %v1401
    %1426 = vmatprep.subr.mxu0 0.0
    %1427 = vmatpush1.msra.mxu0 %v1400
    %1428 = vmatprep.subr.mxu0 0.0
    %1429 = vmatpush1.msra.mxu0 %v1399
    %1430 = vmatprep.subr.mxu0 0.0
    %1431 = vmatpush1.msra.mxu0 %v1398
    %1432 = vmatprep.subr.mxu0 0.0
    %1433 = vmatpush1.msra.mxu0 %v1397
    %1434 = vmatprep.subr.mxu0 0.0
    %1435 = vmatpush1.msra.mxu0 %v1396
    %1436 = vmatprep.subr.mxu0 0.0
    %1437 = vmatpush1.msra.mxu0 %v1395
    %1438 = vmatprep.subr.mxu0 0.0
    %1439 = vmatpush1.msra.mxu0 %v1394
    %1440 = vmatprep.subr.mxu0 0.0
    %1441 = vmatpush1.msra.mxu0 %v1393
    %1442 = vmatprep.subr.mxu0 0.0
    %1443 = vmatpush1.msra.mxu0 %v1392
    %1444 = vmatprep.subr.mxu0 0.0
    %1445 = vmatpush2.msra.mxu0 0.0
    %1446 = vmatprep.subr.mxu0 0.0
    %1447 = vmatpush2.msra.mxu0 0.0
    %1448 = vmatprep.subr.mxu0 0.0
    %1449 = vmatpush2.msra.mxu0 0.0
    %1450 = vmatprep.subr.mxu0 0.0
    %1451 = vmatpush2.msra.mxu0 0.0
    %1452 = vmatprep.subr.mxu0 0.0
    %1453 = vmatpush2.msra.mxu0 0.0
    %1454 = vmatprep.subr.mxu0 0.0
    %1455 = vmatpush2.msra.mxu0 0.0
    %1456 = vmatprep.subr.mxu0 0.0
    %1457 = vmatpush2.msra.mxu0 0.0
    %1458 = vmatprep.subr.mxu0 0.0
    %1459 = vmatpush2.msra.mxu0 0.0
    %1460 = vmatprep.subr.mxu0 0.0
    %1461 = vmatpush2.msra.mxu0 0.0
    %1462 = vmatprep.subr.mxu0 0.0
    %1463 = vmatpush2.msra.mxu0 0.0
    %1464 = vmatprep.subr.mxu0 0.0
    %1465 = vmatpush2.msra.mxu0 0.0
    %1466 = vmatprep.subr.mxu0 0.0
    %1467 = vmatpush2.msra.mxu0 0.0
    %1468 = vmatprep.subr.mxu0 0.0
    %1469 = vmatpush2.msra.mxu0 0.0
    %1470 = vmatprep.subr.mxu0 0.0
    %1471 = vmatpush2.msra.mxu0 0.0
    %1472 = vmatprep.subr.mxu0 0.0
    %1473 = vmatpush2.msra.mxu0 0.0
    %1474 = vmatprep.subr.mxu0 0.0
    %1475 = vmatpush2.msra.mxu0 0.0
    %1476 = vmatprep.mubr.f32.mxu0 0.0
    %1477 = vmatmul.mubr.f32.gmra.mxu0 %v1390
    %v1478 = vpop.f32.mrf.mxu0
    %v1479 = vadd.f32 %v1411, %v1478
    %v1480 = vpop.f32.mrf.mxu0
    %1481 = vmatprep.mubr.f32.mxu0 0.0
    %1482 = vmatmul.mubr.f32.gmra.mxu0 %v1391
    %v1483 = vpop.f32.mrf.mxu0
    %v1484 = vadd.f32 %v1411, %v1483
    %v1485 = vpop.f32.mrf.mxu0
    %1486 = vdwg.mxu0
    %v1487 = vadd.f32 %v1299, %v1479
    %v1488 = vadd.f32 %v1300, %v1484
    %v1489 = vsel %vm40, %v1487, 0.0
    %1490 = vadd.xlane.f32.xlu0 %v1489
    %v1491 = vpop.xlane.xlu0 %1490
    %v1492 = vsel %vm40, %v1488, 0.0
    %1493 = vadd.xlane.f32.xlu0 %v1492
    %v1494 = vpop.xlane.xlu0 %1493
    %v1495 = vmul.f32 %v1491, %v1268
    %v1496 = vmul.f32 %v1494, %v1268
    %v1497 = vsub.f32 %v1487, %v1495
    %v1498 = vsub.f32 %v1488, %v1496
    %v1499 = vmul.f32 %v1497, %v1497
    %v1500 = vmul.f32 %v1498, %v1498
    %v1501 = vsel %vm40, %v1499, 0.0
    %1502 = vadd.xlane.f32.xlu0 %v1501
    %v1503 = vpop.xlane.xlu0 %1502
    %v1504 = vsel %vm40, %v1500, 0.0
    %1505 = vadd.xlane.f32.xlu0 %v1504
    %v1506 = vpop.xlane.xlu0 %1505
    %v1507 = vmul.f32 %v1503, %v1268
    %v1508 = vmul.f32 %v1506, %v1268
    %v1509 = vadd.f32 %v1507, 1e-05
    %v1510 = vadd.f32 %v1508, 1e-05
    %v1511 = vrsqrt.pop %v1509
    %v1512 = vrsqrt.pop %v1510
    %v1513 = vmul.f32 %v1497, %v1511
    %v1514 = vmul.f32 %v1498, %v1512
    %v1515 = vlaneseq
    %v1516 = vshrl.u32 %v1515, 7
    %v1517 = vsub.s32 6, %v1516
    %v1518 = vrot.slane %v31, %v1517
    %v1519 = vmul.f32 %v1513, %v1518
    %v1520 = vmul.f32 %v1514, %v1518
    %v1521 = vlaneseq
    %v1522 = vshrl.u32 %v1521, 7
    %v1523 = vsub.s32 7, %v1522
    %v1524 = vrot.slane %v31, %v1523
    %v1525 = vadd.f32 %v1519, %v1524
    %v1526 = vadd.f32 %v1520, %v1524
    %1527 = vst.msk [vmem:[#allocation2] sm:$0xff] %vm40, %v1525
    %1528 = vst.msk [vmem:[#allocation2 + $0x8] sm:$0xff] %vm40, %v1526
    // Predicated region
    $region30: #{tpu_custom_call.1} parent=1 // pred_check
      _
    $region31: #{tpu_custom_call.1} parent=1 // pred_check_branch
      %1530 = sbr.rel (0) target = $region33
    $region32: #{tpu_custom_call.1} parent=1 // pred_region
      %s1532 = ssub.s32 256, 256
      %1533 = vsyncadd [#allocation3], %s1532
      %s1534 = sshll.u32 [#allocation2], 4
      %s1535 = int_to_ptr.vmem [resolvable:$true] %s1534
      %1540 = dma.vmem_to_hbm [thread:$0]  %s1535, 256, %s7, [#allocation3], 128, 128, 8
    $region33: #{tpu_custom_call.1} parent=1 // pred_fallthru
      _
    // Predicated region
    $region34: #{tpu_custom_call.1} parent=1 // pred_check
      _
    $region35: #{tpu_custom_call.1} parent=1 // pred_check_branch
      %1542 = sbr.rel (0) target = $region37
    $region36: #{tpu_custom_call.1} parent=1 // pred_region
      %1543 = dma.done [#allocation3], 256
    $region37: #{tpu_custom_call.1} parent=1 // pred_fallthru
      _
    %1544 = vsyncpa [#allocation3], 1

</llo_original>
